<compile_context>
chip_gen: v5e
topology: v5e:2x2
jax: 0.10.0
libtpu: 0.0.40
codegen_flags: <defaults>
</compile_context>

<pallas_src>
import functools

import numpy as np
import jax
import jax.numpy as jnp
from jax.experimental import pallas as pl
from jax.experimental.pallas import tpu as pltpu

NEG = -1.0e30              # finite stand-in for -inf (avoids inf-inf NaNs in f32)
INF_THRESH = -NEG / 10.0   # zero_infinity threshold, tied to NEG's magnitude
SP = 128                   # padded extended-target length (>= 2*seq_len + 1)
B_TILE = 8                 # samples per grid step (fills the 8 vreg sublanes)


def _ctc_kernel(x_ref, ext_ref, tl_ref, loss_ref, lp_ref, alpha_ref, *, blank):
    """CTC negative log-likelihood for a tile of B_TILE samples.

    x_ref    : (B_TILE, T, C)   raw logits
    ext_ref  : (B_TILE, SP)     int32 blank-extended targets (padded with blank)
    tl_ref   : (B_TILE, 1)      int32 target lengths
    loss_ref : (B_TILE, 128)    per-sample NLL, broadcast along lanes
    lp_ref   : (T, B_TILE, SP)  scratch: log p(extended label s | t)
    alpha_ref: (B_TILE, SP)     scratch: log-space CTC forward variables
    """
    x = x_ref[...]
    BT, T, C = x.shape

    # log-softmax over the class axis (block covers the full, unpadded C lanes).
    m = jnp.max(x, axis=-1, keepdims=True)
    lse = jnp.log(jnp.sum(jnp.exp(x - m), axis=-1, keepdims=True)) + m
    logp = x - lse                                              # (BT, T, C)

    ext = ext_ref[...]                                          # (BT, SP) int32

    # One-hot of the blank-extended targets, built in-kernel (no HBM traffic).
    c_iota = jax.lax.broadcasted_iota(jnp.int32, (BT, C, SP), 1)
    onehot = (c_iota == ext[:, None, :]).astype(jnp.float32)    # (BT, C, SP)

    # Gather log p at the extended target symbols via batched one-hot matmul.
    # HIGHEST keeps the gather exact in f32; the matmul is tiny (T*C*SP MACs
    # per sample) so the extra MXU passes are negligible.
    lp = jax.lax.dot_general(
        logp, onehot,
        dimension_numbers=(((2,), (1,)), ((0,), (0,))),
        precision=jax.lax.Precision.HIGHEST,
        preferred_element_type=jnp.float32)                     # (BT, T, SP)
    for t in range(T):          # time-major scratch -> clean lp_ref[t] loads
        lp_ref[t] = lp[:, t, :]

    lane = jax.lax.broadcasted_iota(jnp.int32, (BT, SP), 1)

    # skip (s-2) transition mask: legal iff ext[s] != blank and ext[s] != ext[s-2]
    extf = ext.astype(jnp.float32)
    ext_m2 = pltpu.roll(extf, shift=2, axis=1)          # wrapped values gated by lane>=2
    skip_ok = (lane >= 2) & (ext != blank) & (extf != ext_m2)
    skip_add = jnp.where(skip_ok, 0.0, NEG).astype(jnp.float32)

    # final-state mask: terminal states are 2*L and 2*L - 1
    tl = tl_ref[...]                                            # (BT, 1) int32
    send = 2 * tl + 1
    fin_ok = (lane == send - 1) | (lane == send - 2)
    fin_add = jnp.where(fin_ok, 0.0, NEG).astype(jnp.float32)

    # alpha at t = 0: only states 0 and 1 are live.
    alpha_ref[...] = lp_ref[0] + jnp.where(lane < 2, 0.0, NEG).astype(jnp.float32)

    def body(t, carry):
        a = alpha_ref[...]                                      # (BT, SP)
        a1 = jnp.where(lane < 1, NEG, pltpu.roll(a, shift=1, axis=1))
        a2 = jnp.where(lane < 2, NEG, pltpu.roll(a, shift=2, axis=1)) + skip_add
        m3 = jnp.maximum(jnp.maximum(a, a1), a2)
        s3 = jnp.exp(a - m3) + jnp.exp(a1 - m3) + jnp.exp(a2 - m3)
        alpha_ref[...] = lp_ref[t] + m3 + jnp.log(s3)
        return carry

    jax.lax.fori_loop(1, T, body, 0, unroll=True)

    a_fin = alpha_ref[...] + fin_add
    mf = jnp.max(a_fin, axis=-1, keepdims=True)
    nll = -(mf + jnp.log(jnp.sum(jnp.exp(a_fin - mf), axis=-1, keepdims=True)))
    loss_ref[...] = jnp.broadcast_to(nll, (BT, 128)).astype(jnp.float32)


def _ctc_nll_pallas(x, ext, tl, blank):
    """Per-sample CTC NLL.  x: (B_pad, T, C) f32, ext: (B_pad, SP) i32,
    tl: (B_pad, 1) i32.  Returns (B_pad,) f32."""
    B_pad, T, C = x.shape
    assert B_pad % B_TILE == 0
    kernel = functools.partial(_ctc_kernel, blank=int(blank))
    out = pl.pallas_call(
        kernel,
        out_shape=jax.ShapeDtypeStruct((B_pad, 128), jnp.float32),
        grid_spec=pltpu.PrefetchScalarGridSpec(
            num_scalar_prefetch=0,
            grid=(B_pad // B_TILE,),
            in_specs=[
                pl.BlockSpec((B_TILE, T, C), lambda i: (i, 0, 0)),   # logits
                pl.BlockSpec((B_TILE, SP), lambda i: (i, 0)),        # ext targets
                pl.BlockSpec((B_TILE, 1), lambda i: (i, 0)),         # target lens
            ],
            out_specs=pl.BlockSpec((B_TILE, 128), lambda i: (i, 0)),
            scratch_shapes=[
                pltpu.VMEM((T, B_TILE, SP), jnp.float32),   # lp_ext (time-major)
                pltpu.VMEM((B_TILE, SP), jnp.float32),      # alpha
            ],
        ),
        compiler_params=pltpu.CompilerParams(
            dimension_semantics=("parallel",)),   # batch tiles are independent
    )(x, ext, tl)
    return out[:, 0]


class SimpleDictionary:
    """Minimal stand-in for the mmocr Dictionary used by the torch module."""
    def __init__(self, chars):
        self.chars = list(chars)
        self._char2idx = {c: i for i, c in enumerate(self.chars)}
        self.padding_idx = len(self.chars)          # blank / pad index
        self.num_classes = len(self.chars) + 1

    def str2idx(self, text):
        return [self._char2idx[c] for c in text]


class CTCModuleLoss:
    """JAX/Pallas port of the PyTorch CTCModuleLoss."""

    def __init__(self, dictionary, letter_case='unchanged', flatten=True,
                 reduction='mean', zero_infinity=True):
        assert isinstance(flatten, bool)
        assert letter_case in ('unchanged', 'upper', 'lower')
        assert reduction in ('mean', 'sum', 'none')
        self.dictionary = dictionary
        self.letter_case = letter_case
        self.flatten = flatten           # flattened vs padded targets give identical loss
        self.reduction = reduction
        self.zero_infinity = zero_infinity

    def get_targets(self, texts):
        out = []
        for text in texts:
            if self.letter_case in ('upper', 'lower'):
                text = getattr(text, self.letter_case)()
            out.append(self.dictionary.str2idx(text))
        return out

    def __call__(self, outputs, gt_texts):
        # outputs: (B, T, C) logits.  (The torch permute(1,0,2) only adapts the
        # layout nn.CTCLoss expects; semantics are unchanged.)
        B, T, C = outputs.shape
        # TODO(synk): SP=128 caps the time dimension at T <= 63 (2*T+1 <= SP).
        assert 2 * T + 1 <= SP, "sequence length too long for SP=128 state lanes"
        blank = self.dictionary.padding_idx
        assert 0 <= blank < C

        # Targets truncated to T chars, exactly like the torch module
        # (indexes[:seq_len] before nn.CTCLoss).
        targets = [t[:T] for t in self.get_targets(gt_texts)]
        tl = np.array([len(t) for t in targets], dtype=np.int32)

        B_pad = ((B + B_TILE - 1) // B_TILE) * B_TILE
        # blank-extended targets: [blank, l0, blank, l1, ..., blank], padded to SP
        ext = np.full((B_pad, SP), blank, dtype=np.int32)
        for b, t in enumerate(targets):
            if len(t):
                ext[b, 1:2 * len(t) + 1:2] = np.asarray(t, dtype=np.int32)
        tl_pad = np.zeros((B_pad, 1), dtype=np.int32)
        tl_pad[:B, 0] = tl

        x = jnp.asarray(outputs, dtype=jnp.float32)
        if B_pad != B:
            x = jnp.pad(x, ((0, B_pad - B), (0, 0), (0, 0)))

        nll = _ctc_nll_pallas(x, jnp.asarray(ext), jnp.asarray(tl_pad), blank)[:B]
        if self.zero_infinity:
            nll = jnp.where(nll > INF_THRESH, 0.0, nll)
        if self.reduction == 'mean':
            tl_j = jnp.asarray(np.maximum(tl, 1), dtype=jnp.float32)
            return jnp.mean(nll / tl_j)
        if self.reduction == 'sum':
            return jnp.sum(nll)
        return nll


def _ctc_reference_mean_loss(outputs, gt_texts, dictionary):
    """Independent float64 numpy CTC (reduction='mean', zero_infinity=True)."""
    x = np.asarray(outputs, dtype=np.float64)
    B, T, C = x.shape
    blank = dictionary.padding_idx
    m = x.max(-1, keepdims=True)
    logp = x - (np.log(np.exp(x - m).sum(-1, keepdims=True)) + m)
    losses = []
    for b, text in enumerate(gt_texts):
        tgt = dictionary.str2idx(text)[:T]
        L = len(tgt)
        S = 2 * L + 1
        ext = [blank] * S
        ext[1::2] = tgt
        alpha = np.full(S, -np.inf)
        alpha[0] = logp[b, 0, ext[0]]
        if S > 1:
            alpha[1] = logp[b, 0, ext[1]]
        for t in range(1, T):
            new = np.full(S, -np.inf)
            for s in range(S):
                terms = [alpha[s]]
                if s >= 1:
                    terms.append(alpha[s - 1])
                if s >= 2 and ext[s] != blank and ext[s] != ext[s - 2]:
                    terms.append(alpha[s - 2])
                mt = max(terms)
                if np.isinf(mt):
                    new[s] = -np.inf
                else:
                    new[s] = logp[b, t, ext[s]] + mt + np.log(
                        np.sum(np.exp(np.array(terms) - mt)))
            alpha = new
        terms = [alpha[S - 1]] + ([alpha[S - 2]] if S >= 2 else [])
        mt = max(terms)
        nll = np.inf if np.isinf(mt) else -(mt + np.log(np.sum(np.exp(np.array(terms) - mt))))
        if np.isinf(nll):
            nll = 0.0  # zero_infinity
        losses.append(nll / max(L, 1))
    return float(np.mean(losses))


if __name__ == "__main__":
    chars = "abcdefghijklmnopqrstuvwxyz0123456789"
    dictionary = SimpleDictionary(chars)
    B, T = 3, 8
    C = dictionary.num_classes  # 37

    key = jax.random.PRNGKey(0)
    outputs = jax.random.normal(key, (B, T, C), dtype=jnp.float32)
    # "aabbccdd" is infeasible for T=8 (needs >= len + repeats = 12 frames),
    # which exercises the zero_infinity path.
    gt_texts = ["ab3", "hello", "aabbccdd"]

    loss_fn = CTCModuleLoss(dictionary, letter_case='unchanged',
                            flatten=True, reduction='mean', zero_infinity=True)
    loss = jax.block_until_ready(loss_fn(outputs, gt_texts))

    ref = _ctc_reference_mean_loss(np.asarray(outputs), gt_texts, dictionary)
    if not np.allclose(float(loss), ref, rtol=1e-3, atol=1e-3):
        raise AssertionError(f"mismatch: pallas={float(loss)} reference={ref}")
    print("KERNEL_OK")
</pallas_src>

<mosaic_0001>
module attributes {stable_mosaic.version = 11 : i64} {
  func.func @_ctc_kernel(%arg0: i32, %arg1: memref<8x8x37xf32, #tpu.memory_space<vmem>>, %arg2: memref<8x128xi32, #tpu.memory_space<vmem>>, %arg3: memref<8x1xi32, #tpu.memory_space<vmem>>, %arg4: memref<8x128xf32, #tpu.memory_space<vmem>>, %arg5: memref<8x8x128xf32, #tpu.memory_space<vmem>>, %arg6: memref<8x128xf32, #tpu.memory_space<vmem>>) attributes {dimension_semantics = [#tpu.dimension_semantics<parallel>], iteration_bounds = array<i64: 1>, scalar_prefetch = 0 : i64, scratch_operands = 2 : i64, tpu.core_type = #tpu.core_type<tc>, window_params = [{transform_indices = @transform_0, window_bounds = array<i64: 8, 8, 37>}, {transform_indices = @transform_1, window_bounds = array<i64: 8, 128>}, {transform_indices = @transform_2, window_bounds = array<i64: 8, 1>}, {transform_indices = @transform_3, window_bounds = array<i64: 8, 128>}]} {
    %c0 = arith.constant 0 : index
    %c0_0 = arith.constant 0 : index
    %c0_1 = arith.constant 0 : index
    %0 = vector.load %arg1[%c0, %c0_0, %c0_1] : memref<8x8x37xf32, #tpu.memory_space<vmem>>, vector<8x8x37xf32>
    %cst = arith.constant dense<0xFF800000> : vector<8x8xf32>
    %1 = vector.multi_reduction <maximumf>, %0, %cst [2] : vector<8x8x37xf32> to vector<8x8xf32>
    %2 = vector.shape_cast %1 : vector<8x8xf32> to vector<8x8x1xf32>
    %3 = vector.broadcast %2 : vector<8x8x1xf32> to vector<8x8x37xf32>
    %4 = arith.subf %0, %3 : vector<8x8x37xf32>
    %5 = math.exp %4 : vector<8x8x37xf32>
    %cst_2 = arith.constant dense<0.000000e+00> : vector<8x8xf32>
    %6 = vector.multi_reduction <add>, %5, %cst_2 [2] : vector<8x8x37xf32> to vector<8x8xf32>
    %7 = vector.shape_cast %6 : vector<8x8xf32> to vector<8x8x1xf32>
    %8 = math.log %7 : vector<8x8x1xf32>
    %9 = arith.addf %8, %2 : vector<8x8x1xf32>
    %10 = vector.broadcast %9 : vector<8x8x1xf32> to vector<8x8x37xf32>
    %11 = arith.subf %0, %10 : vector<8x8x37xf32>
    %c0_3 = arith.constant 0 : index
    %c0_4 = arith.constant 0 : index
    %12 = vector.load %arg2[%c0_3, %c0_4] : memref<8x128xi32, #tpu.memory_space<vmem>>, vector<8x128xi32>
    %13 = tpu.iota {dimensions = array<i32: 1>} : vector<8x37x128xi32>
    %14 = vector.shape_cast %12 : vector<8x128xi32> to vector<8x1x128xi32>
    %15 = vector.broadcast %14 : vector<8x1x128xi32> to vector<8x37x128xi32>
    %16 = arith.cmpi eq, %13, %15 : vector<8x37x128xi32>
    %17 = arith.extui %16 : vector<8x37x128xi1> to vector<8x37x128xi32>
    %18 = arith.sitofp %17 : vector<8x37x128xi32> to vector<8x37x128xf32>
    %cst_5 = arith.constant dense<0.000000e+00> : vector<8x8x128xf32>
    %19 = tpu.matmul %11, %18, %cst_5 {dimension_numbers = #tpu.dot_dimension_numbers<[2], [1], [1], [2], [0, 0, 0, 1, 1, 2], [0], [0]>, precision = #tpu.contract_precision<fp32>} : vector<8x8x37xf32>, vector<8x37x128xf32>, vector<8x8x128xf32> -> vector<8x8x128xf32>
    %20 = vector.extract_strided_slice %19 {offsets = [0, 0, 0], sizes = [8, 1, 128], strides = [1, 1, 1]} : vector<8x8x128xf32> to vector<8x1x128xf32>
    %21 = vector.shape_cast %20 : vector<8x1x128xf32> to vector<8x128xf32>
    %c0_6 = arith.constant 0 : index
    %c0_7 = arith.constant 0 : index
    %c0_8 = arith.constant 0 : index
    %22 = vector.load %arg5[%c0_6, %c0_7, %c0_8] : memref<8x8x128xf32, #tpu.memory_space<vmem>>, vector<1x8x128xf32>
    %23 = vector.shape_cast %22 : vector<1x8x128xf32> to vector<8x128xf32>
    %24 = vector.shape_cast %21 : vector<8x128xf32> to vector<1x8x128xf32>
    tpu.vector_store %arg5[%c0_6, %c0_7, %c0_8], %24 {strides = array<i32>} : memref<8x8x128xf32, #tpu.memory_space<vmem>>, vector<1x8x128xf32>,
    %25 = vector.extract_strided_slice %19 {offsets = [0, 1, 0], sizes = [8, 1, 128], strides = [1, 1, 1]} : vector<8x8x128xf32> to vector<8x1x128xf32>
    %26 = vector.shape_cast %25 : vector<8x1x128xf32> to vector<8x128xf32>
    %c1 = arith.constant 1 : index
    %c0_9 = arith.constant 0 : index
    %c0_10 = arith.constant 0 : index
    %27 = vector.load %arg5[%c1, %c0_9, %c0_10] : memref<8x8x128xf32, #tpu.memory_space<vmem>>, vector<1x8x128xf32>
    %28 = vector.shape_cast %27 : vector<1x8x128xf32> to vector<8x128xf32>
    %29 = vector.shape_cast %26 : vector<8x128xf32> to vector<1x8x128xf32>
    tpu.vector_store %arg5[%c1, %c0_9, %c0_10], %29 {strides = array<i32>} : memref<8x8x128xf32, #tpu.memory_space<vmem>>, vector<1x8x128xf32>,
    %30 = vector.extract_strided_slice %19 {offsets = [0, 2, 0], sizes = [8, 1, 128], strides = [1, 1, 1]} : vector<8x8x128xf32> to vector<8x1x128xf32>
    %31 = vector.shape_cast %30 : vector<8x1x128xf32> to vector<8x128xf32>
    %c2 = arith.constant 2 : index
    %c0_11 = arith.constant 0 : index
    %c0_12 = arith.constant 0 : index
    %32 = vector.load %arg5[%c2, %c0_11, %c0_12] : memref<8x8x128xf32, #tpu.memory_space<vmem>>, vector<1x8x128xf32>
    %33 = vector.shape_cast %32 : vector<1x8x128xf32> to vector<8x128xf32>
    %34 = vector.shape_cast %31 : vector<8x128xf32> to vector<1x8x128xf32>
    tpu.vector_store %arg5[%c2, %c0_11, %c0_12], %34 {strides = array<i32>} : memref<8x8x128xf32, #tpu.memory_space<vmem>>, vector<1x8x128xf32>,
    %35 = vector.extract_strided_slice %19 {offsets = [0, 3, 0], sizes = [8, 1, 128], strides = [1, 1, 1]} : vector<8x8x128xf32> to vector<8x1x128xf32>
    %36 = vector.shape_cast %35 : vector<8x1x128xf32> to vector<8x128xf32>
    %c3 = arith.constant 3 : index
    %c0_13 = arith.constant 0 : index
    %c0_14 = arith.constant 0 : index
    %37 = vector.load %arg5[%c3, %c0_13, %c0_14] : memref<8x8x128xf32, #tpu.memory_space<vmem>>, vector<1x8x128xf32>
    %38 = vector.shape_cast %37 : vector<1x8x128xf32> to vector<8x128xf32>
    %39 = vector.shape_cast %36 : vector<8x128xf32> to vector<1x8x128xf32>
    tpu.vector_store %arg5[%c3, %c0_13, %c0_14], %39 {strides = array<i32>} : memref<8x8x128xf32, #tpu.memory_space<vmem>>, vector<1x8x128xf32>,
    %40 = vector.extract_strided_slice %19 {offsets = [0, 4, 0], sizes = [8, 1, 128], strides = [1, 1, 1]} : vector<8x8x128xf32> to vector<8x1x128xf32>
    %41 = vector.shape_cast %40 : vector<8x1x128xf32> to vector<8x128xf32>
    %c4 = arith.constant 4 : index
    %c0_15 = arith.constant 0 : index
    %c0_16 = arith.constant 0 : index
    %42 = vector.load %arg5[%c4, %c0_15, %c0_16] : memref<8x8x128xf32, #tpu.memory_space<vmem>>, vector<1x8x128xf32>
    %43 = vector.shape_cast %42 : vector<1x8x128xf32> to vector<8x128xf32>
    %44 = vector.shape_cast %41 : vector<8x128xf32> to vector<1x8x128xf32>
    tpu.vector_store %arg5[%c4, %c0_15, %c0_16], %44 {strides = array<i32>} : memref<8x8x128xf32, #tpu.memory_space<vmem>>, vector<1x8x128xf32>,
    %45 = vector.extract_strided_slice %19 {offsets = [0, 5, 0], sizes = [8, 1, 128], strides = [1, 1, 1]} : vector<8x8x128xf32> to vector<8x1x128xf32>
    %46 = vector.shape_cast %45 : vector<8x1x128xf32> to vector<8x128xf32>
    %c5 = arith.constant 5 : index
    %c0_17 = arith.constant 0 : index
    %c0_18 = arith.constant 0 : index
    %47 = vector.load %arg5[%c5, %c0_17, %c0_18] : memref<8x8x128xf32, #tpu.memory_space<vmem>>, vector<1x8x128xf32>
    %48 = vector.shape_cast %47 : vector<1x8x128xf32> to vector<8x128xf32>
    %49 = vector.shape_cast %46 : vector<8x128xf32> to vector<1x8x128xf32>
    tpu.vector_store %arg5[%c5, %c0_17, %c0_18], %49 {strides = array<i32>} : memref<8x8x128xf32, #tpu.memory_space<vmem>>, vector<1x8x128xf32>,
    %50 = vector.extract_strided_slice %19 {offsets = [0, 6, 0], sizes = [8, 1, 128], strides = [1, 1, 1]} : vector<8x8x128xf32> to vector<8x1x128xf32>
    %51 = vector.shape_cast %50 : vector<8x1x128xf32> to vector<8x128xf32>
    %c6 = arith.constant 6 : index
    %c0_19 = arith.constant 0 : index
    %c0_20 = arith.constant 0 : index
    %52 = vector.load %arg5[%c6, %c0_19, %c0_20] : memref<8x8x128xf32, #tpu.memory_space<vmem>>, vector<1x8x128xf32>
    %53 = vector.shape_cast %52 : vector<1x8x128xf32> to vector<8x128xf32>
    %54 = vector.shape_cast %51 : vector<8x128xf32> to vector<1x8x128xf32>
    tpu.vector_store %arg5[%c6, %c0_19, %c0_20], %54 {strides = array<i32>} : memref<8x8x128xf32, #tpu.memory_space<vmem>>, vector<1x8x128xf32>,
    %55 = vector.extract_strided_slice %19 {offsets = [0, 7, 0], sizes = [8, 1, 128], strides = [1, 1, 1]} : vector<8x8x128xf32> to vector<8x1x128xf32>
    %56 = vector.shape_cast %55 : vector<8x1x128xf32> to vector<8x128xf32>
    %c7 = arith.constant 7 : index
    %c0_21 = arith.constant 0 : index
    %c0_22 = arith.constant 0 : index
    %57 = vector.load %arg5[%c7, %c0_21, %c0_22] : memref<8x8x128xf32, #tpu.memory_space<vmem>>, vector<1x8x128xf32>
    %58 = vector.shape_cast %57 : vector<1x8x128xf32> to vector<8x128xf32>
    %59 = vector.shape_cast %56 : vector<8x128xf32> to vector<1x8x128xf32>
    tpu.vector_store %arg5[%c7, %c0_21, %c0_22], %59 {strides = array<i32>} : memref<8x8x128xf32, #tpu.memory_space<vmem>>, vector<1x8x128xf32>,
    %60 = tpu.iota {dimensions = array<i32: 1>} : vector<8x128xi32>
    %61 = arith.sitofp %12 : vector<8x128xi32> to vector<8x128xf32>
    %c2_i32 = arith.constant 2 : i32
    %62 = tpu.dynamic_rotate %61 by %c2_i32 dim 1 : vector<8x128xf32>, i32 -> vector<8x128xf32>
    %c2_i32_23 = arith.constant 2 : i32
    %63 = vector.broadcast %c2_i32_23 : i32 to vector<8x128xi32>
    %64 = arith.cmpi sge, %60, %63 : vector<8x128xi32>
    %c36_i32 = arith.constant 36 : i32
    %65 = vector.broadcast %c36_i32 : i32 to vector<8x128xi32>
    %66 = arith.cmpi ne, %12, %65 : vector<8x128xi32>
    %67 = arith.andi %64, %66 : vector<8x128xi1>
    %68 = arith.cmpf one, %61, %62 : vector<8x128xf32>
    %69 = arith.andi %67, %68 : vector<8x128xi1>
    %cst_24 = arith.constant 0.000000e+00 : f32
    %cst_25 = arith.constant -1.000000e+30 : f32
    %70 = vector.broadcast %cst_24 : f32 to vector<8x128xf32>
    %71 = vector.broadcast %cst_25 : f32 to vector<8x128xf32>
    %72 = arith.select %69, %70, %71 : vector<8x128xi1>, vector<8x128xf32>
    %c0_26 = arith.constant 0 : index
    %c0_27 = arith.constant 0 : index
    %73 = vector.load %arg3[%c0_26, %c0_27] : memref<8x1xi32, #tpu.memory_space<vmem>>, vector<8x1xi32>
    %c2_i32_28 = arith.constant 2 : i32
    %74 = vector.broadcast %c2_i32_28 : i32 to vector<8x1xi32>
    %75 = arith.muli %74, %73 : vector<8x1xi32>
    %c1_i32 = arith.constant 1 : i32
    %76 = vector.broadcast %c1_i32 : i32 to vector<8x1xi32>
    %77 = arith.addi %75, %76 : vector<8x1xi32>
    %c1_i32_29 = arith.constant 1 : i32
    %78 = vector.broadcast %c1_i32_29 : i32 to vector<8x1xi32>
    %79 = arith.subi %77, %78 : vector<8x1xi32>
    %80 = vector.broadcast %79 : vector<8x1xi32> to vector<8x128xi32>
    %81 = arith.cmpi eq, %60, %80 : vector<8x128xi32>
    %c2_i32_30 = arith.constant 2 : i32
    %82 = vector.broadcast %c2_i32_30 : i32 to vector<8x1xi32>
    %83 = arith.subi %77, %82 : vector<8x1xi32>
    %84 = vector.broadcast %83 : vector<8x1xi32> to vector<8x128xi32>
    %85 = arith.cmpi eq, %60, %84 : vector<8x128xi32>
    %86 = arith.ori %81, %85 : vector<8x128xi1>
    %cst_31 = arith.constant 0.000000e+00 : f32
    %cst_32 = arith.constant -1.000000e+30 : f32
    %87 = vector.broadcast %cst_31 : f32 to vector<8x128xf32>
    %88 = vector.broadcast %cst_32 : f32 to vector<8x128xf32>
    %89 = arith.select %86, %87, %88 : vector<8x128xi1>, vector<8x128xf32>
    %c0_33 = arith.constant 0 : index
    %c0_34 = arith.constant 0 : index
    %c0_35 = arith.constant 0 : index
    %90 = vector.load %arg5[%c0_33, %c0_34, %c0_35] : memref<8x8x128xf32, #tpu.memory_space<vmem>>, vector<1x8x128xf32>
    %91 = vector.shape_cast %90 : vector<1x8x128xf32> to vector<8x128xf32>
    %c2_i32_36 = arith.constant 2 : i32
    %92 = vector.broadcast %c2_i32_36 : i32 to vector<8x128xi32>
    %93 = arith.cmpi slt, %60, %92 : vector<8x128xi32>
    %cst_37 = arith.constant 0.000000e+00 : f32
    %cst_38 = arith.constant -1.000000e+30 : f32
    %94 = vector.broadcast %cst_37 : f32 to vector<8x128xf32>
    %95 = vector.broadcast %cst_38 : f32 to vector<8x128xf32>
    %96 = arith.select %93, %94, %95 : vector<8x128xi1>, vector<8x128xf32>
    %97 = arith.addf %91, %96 : vector<8x128xf32>
    %c0_39 = arith.constant 0 : index
    %c0_40 = arith.constant 0 : index
    %98 = vector.load %arg6[%c0_39, %c0_40] : memref<8x128xf32, #tpu.memory_space<vmem>>, vector<8x128xf32>
    tpu.vector_store %arg6[%c0_39, %c0_40], %97 {strides = array<i32>} : memref<8x128xf32, #tpu.memory_space<vmem>>, vector<8x128xf32>,
    %c1_i32_41 = arith.constant 1 : i32
    %c0_42 = arith.constant 0 : index
    %c0_43 = arith.constant 0 : index
    %99 = vector.load %arg6[%c0_42, %c0_43] : memref<8x128xf32, #tpu.memory_space<vmem>>, vector<8x128xf32>
    %c1_i32_44 = arith.constant 1 : i32
    %100 = vector.broadcast %c1_i32_44 : i32 to vector<8x128xi32>
    %101 = arith.cmpi slt, %60, %100 : vector<8x128xi32>
    %c1_i32_45 = arith.constant 1 : i32
    %102 = tpu.dynamic_rotate %99 by %c1_i32_45 dim 1 : vector<8x128xf32>, i32 -> vector<8x128xf32>
    %cst_46 = arith.constant -1.000000e+30 : f32
    %103 = vector.broadcast %cst_46 : f32 to vector<8x128xf32>
    %104 = arith.select %101, %103, %102 : vector<8x128xi1>, vector<8x128xf32>
    %c2_i32_47 = arith.constant 2 : i32
    %105 = vector.broadcast %c2_i32_47 : i32 to vector<8x128xi32>
    %106 = arith.cmpi slt, %60, %105 : vector<8x128xi32>
    %c2_i32_48 = arith.constant 2 : i32
    %107 = tpu.dynamic_rotate %99 by %c2_i32_48 dim 1 : vector<8x128xf32>, i32 -> vector<8x128xf32>
    %cst_49 = arith.constant -1.000000e+30 : f32
    %108 = vector.broadcast %cst_49 : f32 to vector<8x128xf32>
    %109 = arith.select %106, %108, %107 : vector<8x128xi1>, vector<8x128xf32>
    %110 = arith.addf %109, %72 : vector<8x128xf32>
    %111 = arith.maximumf %99, %104 : vector<8x128xf32>
    %112 = arith.maximumf %111, %110 : vector<8x128xf32>
    %113 = arith.subf %99, %112 : vector<8x128xf32>
    %114 = math.exp %113 : vector<8x128xf32>
    %115 = arith.subf %104, %112 : vector<8x128xf32>
    %116 = math.exp %115 : vector<8x128xf32>
    %117 = arith.addf %114, %116 : vector<8x128xf32>
    %118 = arith.subf %110, %112 : vector<8x128xf32>
    %119 = math.exp %118 : vector<8x128xf32>
    %120 = arith.addf %117, %119 : vector<8x128xf32>
    %121 = arith.index_cast %c1_i32_41 : i32 to index
    %c0_50 = arith.constant 0 : index
    %c0_51 = arith.constant 0 : index
    %122 = vector.load %arg5[%121, %c0_50, %c0_51] : memref<8x8x128xf32, #tpu.memory_space<vmem>>, vector<1x8x128xf32>
    %123 = vector.shape_cast %122 : vector<1x8x128xf32> to vector<8x128xf32>
    %124 = arith.addf %123, %112 : vector<8x128xf32>
    %125 = math.log %120 : vector<8x128xf32>
    %126 = arith.addf %124, %125 : vector<8x128xf32>
    %c0_52 = arith.constant 0 : index
    %c0_53 = arith.constant 0 : index
    %127 = vector.load %arg6[%c0_52, %c0_53] : memref<8x128xf32, #tpu.memory_space<vmem>>, vector<8x128xf32>
    tpu.vector_store %arg6[%c0_52, %c0_53], %126 {strides = array<i32>} : memref<8x128xf32, #tpu.memory_space<vmem>>, vector<8x128xf32>,
    %c2_i32_54 = arith.constant 2 : i32
    %c0_55 = arith.constant 0 : index
    %c0_56 = arith.constant 0 : index
    %128 = vector.load %arg6[%c0_55, %c0_56] : memref<8x128xf32, #tpu.memory_space<vmem>>, vector<8x128xf32>
    %c1_i32_57 = arith.constant 1 : i32
    %129 = vector.broadcast %c1_i32_57 : i32 to vector<8x128xi32>
    %130 = arith.cmpi slt, %60, %129 : vector<8x128xi32>
    %c1_i32_58 = arith.constant 1 : i32
    %131 = tpu.dynamic_rotate %128 by %c1_i32_58 dim 1 : vector<8x128xf32>, i32 -> vector<8x128xf32>
    %cst_59 = arith.constant -1.000000e+30 : f32
    %132 = vector.broadcast %cst_59 : f32 to vector<8x128xf32>
    %133 = arith.select %130, %132, %131 : vector<8x128xi1>, vector<8x128xf32>
    %c2_i32_60 = arith.constant 2 : i32
    %134 = vector.broadcast %c2_i32_60 : i32 to vector<8x128xi32>
    %135 = arith.cmpi slt, %60, %134 : vector<8x128xi32>
    %c2_i32_61 = arith.constant 2 : i32
    %136 = tpu.dynamic_rotate %128 by %c2_i32_61 dim 1 : vector<8x128xf32>, i32 -> vector<8x128xf32>
    %cst_62 = arith.constant -1.000000e+30 : f32
    %137 = vector.broadcast %cst_62 : f32 to vector<8x128xf32>
    %138 = arith.select %135, %137, %136 : vector<8x128xi1>, vector<8x128xf32>
    %139 = arith.addf %138, %72 : vector<8x128xf32>
    %140 = arith.maximumf %128, %133 : vector<8x128xf32>
    %141 = arith.maximumf %140, %139 : vector<8x128xf32>
    %142 = arith.subf %128, %141 : vector<8x128xf32>
    %143 = math.exp %142 : vector<8x128xf32>
    %144 = arith.subf %133, %141 : vector<8x128xf32>
    %145 = math.exp %144 : vector<8x128xf32>
    %146 = arith.addf %143, %145 : vector<8x128xf32>
    %147 = arith.subf %139, %141 : vector<8x128xf32>
    %148 = math.exp %147 : vector<8x128xf32>
    %149 = arith.addf %146, %148 : vector<8x128xf32>
    %150 = arith.index_cast %c2_i32_54 : i32 to index
    %c0_63 = arith.constant 0 : index
    %c0_64 = arith.constant 0 : index
    %151 = vector.load %arg5[%150, %c0_63, %c0_64] : memref<8x8x128xf32, #tpu.memory_space<vmem>>, vector<1x8x128xf32>
    %152 = vector.shape_cast %151 : vector<1x8x128xf32> to vector<8x128xf32>
    %153 = arith.addf %152, %141 : vector<8x128xf32>
    %154 = math.log %149 : vector<8x128xf32>
    %155 = arith.addf %153, %154 : vector<8x128xf32>
    %c0_65 = arith.constant 0 : index
    %c0_66 = arith.constant 0 : index
    %156 = vector.load %arg6[%c0_65, %c0_66] : memref<8x128xf32, #tpu.memory_space<vmem>>, vector<8x128xf32>
    tpu.vector_store %arg6[%c0_65, %c0_66], %155 {strides = array<i32>} : memref<8x128xf32, #tpu.memory_space<vmem>>, vector<8x128xf32>,
    %c3_i32 = arith.constant 3 : i32
    %c0_67 = arith.constant 0 : index
    %c0_68 = arith.constant 0 : index
    %157 = vector.load %arg6[%c0_67, %c0_68] : memref<8x128xf32, #tpu.memory_space<vmem>>, vector<8x128xf32>
    %c1_i32_69 = arith.constant 1 : i32
    %158 = vector.broadcast %c1_i32_69 : i32 to vector<8x128xi32>
    %159 = arith.cmpi slt, %60, %158 : vector<8x128xi32>
    %c1_i32_70 = arith.constant 1 : i32
    %160 = tpu.dynamic_rotate %157 by %c1_i32_70 dim 1 : vector<8x128xf32>, i32 -> vector<8x128xf32>
    %cst_71 = arith.constant -1.000000e+30 : f32
    %161 = vector.broadcast %cst_71 : f32 to vector<8x128xf32>
    %162 = arith.select %159, %161, %160 : vector<8x128xi1>, vector<8x128xf32>
    %c2_i32_72 = arith.constant 2 : i32
    %163 = vector.broadcast %c2_i32_72 : i32 to vector<8x128xi32>
    %164 = arith.cmpi slt, %60, %163 : vector<8x128xi32>
    %c2_i32_73 = arith.constant 2 : i32
    %165 = tpu.dynamic_rotate %157 by %c2_i32_73 dim 1 : vector<8x128xf32>, i32 -> vector<8x128xf32>
    %cst_74 = arith.constant -1.000000e+30 : f32
    %166 = vector.broadcast %cst_74 : f32 to vector<8x128xf32>
    %167 = arith.select %164, %166, %165 : vector<8x128xi1>, vector<8x128xf32>
    %168 = arith.addf %167, %72 : vector<8x128xf32>
    %169 = arith.maximumf %157, %162 : vector<8x128xf32>
    %170 = arith.maximumf %169, %168 : vector<8x128xf32>
    %171 = arith.subf %157, %170 : vector<8x128xf32>
    %172 = math.exp %171 : vector<8x128xf32>
    %173 = arith.subf %162, %170 : vector<8x128xf32>
    %174 = math.exp %173 : vector<8x128xf32>
    %175 = arith.addf %172, %174 : vector<8x128xf32>
    %176 = arith.subf %168, %170 : vector<8x128xf32>
    %177 = math.exp %176 : vector<8x128xf32>
    %178 = arith.addf %175, %177 : vector<8x128xf32>
    %179 = arith.index_cast %c3_i32 : i32 to index
    %c0_75 = arith.constant 0 : index
    %c0_76 = arith.constant 0 : index
    %180 = vector.load %arg5[%179, %c0_75, %c0_76] : memref<8x8x128xf32, #tpu.memory_space<vmem>>, vector<1x8x128xf32>
    %181 = vector.shape_cast %180 : vector<1x8x128xf32> to vector<8x128xf32>
    %182 = arith.addf %181, %170 : vector<8x128xf32>
    %183 = math.log %178 : vector<8x128xf32>
    %184 = arith.addf %182, %183 : vector<8x128xf32>
    %c0_77 = arith.constant 0 : index
    %c0_78 = arith.constant 0 : index
    %185 = vector.load %arg6[%c0_77, %c0_78] : memref<8x128xf32, #tpu.memory_space<vmem>>, vector<8x128xf32>
    tpu.vector_store %arg6[%c0_77, %c0_78], %184 {strides = array<i32>} : memref<8x128xf32, #tpu.memory_space<vmem>>, vector<8x128xf32>,
    %c4_i32 = arith.constant 4 : i32
    %c0_79 = arith.constant 0 : index
    %c0_80 = arith.constant 0 : index
    %186 = vector.load %arg6[%c0_79, %c0_80] : memref<8x128xf32, #tpu.memory_space<vmem>>, vector<8x128xf32>
    %c1_i32_81 = arith.constant 1 : i32
    %187 = vector.broadcast %c1_i32_81 : i32 to vector<8x128xi32>
    %188 = arith.cmpi slt, %60, %187 : vector<8x128xi32>
    %c1_i32_82 = arith.constant 1 : i32
    %189 = tpu.dynamic_rotate %186 by %c1_i32_82 dim 1 : vector<8x128xf32>, i32 -> vector<8x128xf32>
    %cst_83 = arith.constant -1.000000e+30 : f32
    %190 = vector.broadcast %cst_83 : f32 to vector<8x128xf32>
    %191 = arith.select %188, %190, %189 : vector<8x128xi1>, vector<8x128xf32>
    %c2_i32_84 = arith.constant 2 : i32
    %192 = vector.broadcast %c2_i32_84 : i32 to vector<8x128xi32>
    %193 = arith.cmpi slt, %60, %192 : vector<8x128xi32>
    %c2_i32_85 = arith.constant 2 : i32
    %194 = tpu.dynamic_rotate %186 by %c2_i32_85 dim 1 : vector<8x128xf32>, i32 -> vector<8x128xf32>
    %cst_86 = arith.constant -1.000000e+30 : f32
    %195 = vector.broadcast %cst_86 : f32 to vector<8x128xf32>
    %196 = arith.select %193, %195, %194 : vector<8x128xi1>, vector<8x128xf32>
    %197 = arith.addf %196, %72 : vector<8x128xf32>
    %198 = arith.maximumf %186, %191 : vector<8x128xf32>
    %199 = arith.maximumf %198, %197 : vector<8x128xf32>
    %200 = arith.subf %186, %199 : vector<8x128xf32>
    %201 = math.exp %200 : vector<8x128xf32>
    %202 = arith.subf %191, %199 : vector<8x128xf32>
    %203 = math.exp %202 : vector<8x128xf32>
    %204 = arith.addf %201, %203 : vector<8x128xf32>
    %205 = arith.subf %197, %199 : vector<8x128xf32>
    %206 = math.exp %205 : vector<8x128xf32>
    %207 = arith.addf %204, %206 : vector<8x128xf32>
    %208 = arith.index_cast %c4_i32 : i32 to index
    %c0_87 = arith.constant 0 : index
    %c0_88 = arith.constant 0 : index
    %209 = vector.load %arg5[%208, %c0_87, %c0_88] : memref<8x8x128xf32, #tpu.memory_space<vmem>>, vector<1x8x128xf32>
    %210 = vector.shape_cast %209 : vector<1x8x128xf32> to vector<8x128xf32>
    %211 = arith.addf %210, %199 : vector<8x128xf32>
    %212 = math.log %207 : vector<8x128xf32>
    %213 = arith.addf %211, %212 : vector<8x128xf32>
    %c0_89 = arith.constant 0 : index
    %c0_90 = arith.constant 0 : index
    %214 = vector.load %arg6[%c0_89, %c0_90] : memref<8x128xf32, #tpu.memory_space<vmem>>, vector<8x128xf32>
    tpu.vector_store %arg6[%c0_89, %c0_90], %213 {strides = array<i32>} : memref<8x128xf32, #tpu.memory_space<vmem>>, vector<8x128xf32>,
    %c5_i32 = arith.constant 5 : i32
    %c0_91 = arith.constant 0 : index
    %c0_92 = arith.constant 0 : index
    %215 = vector.load %arg6[%c0_91, %c0_92] : memref<8x128xf32, #tpu.memory_space<vmem>>, vector<8x128xf32>
    %c1_i32_93 = arith.constant 1 : i32
    %216 = vector.broadcast %c1_i32_93 : i32 to vector<8x128xi32>
    %217 = arith.cmpi slt, %60, %216 : vector<8x128xi32>
    %c1_i32_94 = arith.constant 1 : i32
    %218 = tpu.dynamic_rotate %215 by %c1_i32_94 dim 1 : vector<8x128xf32>, i32 -> vector<8x128xf32>
    %cst_95 = arith.constant -1.000000e+30 : f32
    %219 = vector.broadcast %cst_95 : f32 to vector<8x128xf32>
    %220 = arith.select %217, %219, %218 : vector<8x128xi1>, vector<8x128xf32>
    %c2_i32_96 = arith.constant 2 : i32
    %221 = vector.broadcast %c2_i32_96 : i32 to vector<8x128xi32>
    %222 = arith.cmpi slt, %60, %221 : vector<8x128xi32>
    %c2_i32_97 = arith.constant 2 : i32
    %223 = tpu.dynamic_rotate %215 by %c2_i32_97 dim 1 : vector<8x128xf32>, i32 -> vector<8x128xf32>
    %cst_98 = arith.constant -1.000000e+30 : f32
    %224 = vector.broadcast %cst_98 : f32 to vector<8x128xf32>
    %225 = arith.select %222, %224, %223 : vector<8x128xi1>, vector<8x128xf32>
    %226 = arith.addf %225, %72 : vector<8x128xf32>
    %227 = arith.maximumf %215, %220 : vector<8x128xf32>
    %228 = arith.maximumf %227, %226 : vector<8x128xf32>
    %229 = arith.subf %215, %228 : vector<8x128xf32>
    %230 = math.exp %229 : vector<8x128xf32>
    %231 = arith.subf %220, %228 : vector<8x128xf32>
    %232 = math.exp %231 : vector<8x128xf32>
    %233 = arith.addf %230, %232 : vector<8x128xf32>
    %234 = arith.subf %226, %228 : vector<8x128xf32>
    %235 = math.exp %234 : vector<8x128xf32>
    %236 = arith.addf %233, %235 : vector<8x128xf32>
    %237 = arith.index_cast %c5_i32 : i32 to index
    %c0_99 = arith.constant 0 : index
    %c0_100 = arith.constant 0 : index
    %238 = vector.load %arg5[%237, %c0_99, %c0_100] : memref<8x8x128xf32, #tpu.memory_space<vmem>>, vector<1x8x128xf32>
    %239 = vector.shape_cast %238 : vector<1x8x128xf32> to vector<8x128xf32>
    %240 = arith.addf %239, %228 : vector<8x128xf32>
    %241 = math.log %236 : vector<8x128xf32>
    %242 = arith.addf %240, %241 : vector<8x128xf32>
    %c0_101 = arith.constant 0 : index
    %c0_102 = arith.constant 0 : index
    %243 = vector.load %arg6[%c0_101, %c0_102] : memref<8x128xf32, #tpu.memory_space<vmem>>, vector<8x128xf32>
    tpu.vector_store %arg6[%c0_101, %c0_102], %242 {strides = array<i32>} : memref<8x128xf32, #tpu.memory_space<vmem>>, vector<8x128xf32>,
    %c6_i32 = arith.constant 6 : i32
    %c0_103 = arith.constant 0 : index
    %c0_104 = arith.constant 0 : index
    %244 = vector.load %arg6[%c0_103, %c0_104] : memref<8x128xf32, #tpu.memory_space<vmem>>, vector<8x128xf32>
    %c1_i32_105 = arith.constant 1 : i32
    %245 = vector.broadcast %c1_i32_105 : i32 to vector<8x128xi32>
    %246 = arith.cmpi slt, %60, %245 : vector<8x128xi32>
    %c1_i32_106 = arith.constant 1 : i32
    %247 = tpu.dynamic_rotate %244 by %c1_i32_106 dim 1 : vector<8x128xf32>, i32 -> vector<8x128xf32>
    %cst_107 = arith.constant -1.000000e+30 : f32
    %248 = vector.broadcast %cst_107 : f32 to vector<8x128xf32>
    %249 = arith.select %246, %248, %247 : vector<8x128xi1>, vector<8x128xf32>
    %c2_i32_108 = arith.constant 2 : i32
    %250 = vector.broadcast %c2_i32_108 : i32 to vector<8x128xi32>
    %251 = arith.cmpi slt, %60, %250 : vector<8x128xi32>
    %c2_i32_109 = arith.constant 2 : i32
    %252 = tpu.dynamic_rotate %244 by %c2_i32_109 dim 1 : vector<8x128xf32>, i32 -> vector<8x128xf32>
    %cst_110 = arith.constant -1.000000e+30 : f32
    %253 = vector.broadcast %cst_110 : f32 to vector<8x128xf32>
    %254 = arith.select %251, %253, %252 : vector<8x128xi1>, vector<8x128xf32>
    %255 = arith.addf %254, %72 : vector<8x128xf32>
    %256 = arith.maximumf %244, %249 : vector<8x128xf32>
    %257 = arith.maximumf %256, %255 : vector<8x128xf32>
    %258 = arith.subf %244, %257 : vector<8x128xf32>
    %259 = math.exp %258 : vector<8x128xf32>
    %260 = arith.subf %249, %257 : vector<8x128xf32>
    %261 = math.exp %260 : vector<8x128xf32>
    %262 = arith.addf %259, %261 : vector<8x128xf32>
    %263 = arith.subf %255, %257 : vector<8x128xf32>
    %264 = math.exp %263 : vector<8x128xf32>
    %265 = arith.addf %262, %264 : vector<8x128xf32>
    %266 = arith.index_cast %c6_i32 : i32 to index
    %c0_111 = arith.constant 0 : index
    %c0_112 = arith.constant 0 : index
    %267 = vector.load %arg5[%266, %c0_111, %c0_112] : memref<8x8x128xf32, #tpu.memory_space<vmem>>, vector<1x8x128xf32>
    %268 = vector.shape_cast %267 : vector<1x8x128xf32> to vector<8x128xf32>
    %269 = arith.addf %268, %257 : vector<8x128xf32>
    %270 = math.log %265 : vector<8x128xf32>
    %271 = arith.addf %269, %270 : vector<8x128xf32>
    %c0_113 = arith.constant 0 : index
    %c0_114 = arith.constant 0 : index
    %272 = vector.load %arg6[%c0_113, %c0_114] : memref<8x128xf32, #tpu.memory_space<vmem>>, vector<8x128xf32>
    tpu.vector_store %arg6[%c0_113, %c0_114], %271 {strides = array<i32>} : memref<8x128xf32, #tpu.memory_space<vmem>>, vector<8x128xf32>,
    %c7_i32 = arith.constant 7 : i32
    %c0_115 = arith.constant 0 : index
    %c0_116 = arith.constant 0 : index
    %273 = vector.load %arg6[%c0_115, %c0_116] : memref<8x128xf32, #tpu.memory_space<vmem>>, vector<8x128xf32>
    %c1_i32_117 = arith.constant 1 : i32
    %274 = vector.broadcast %c1_i32_117 : i32 to vector<8x128xi32>
    %275 = arith.cmpi slt, %60, %274 : vector<8x128xi32>
    %c1_i32_118 = arith.constant 1 : i32
    %276 = tpu.dynamic_rotate %273 by %c1_i32_118 dim 1 : vector<8x128xf32>, i32 -> vector<8x128xf32>
    %cst_119 = arith.constant -1.000000e+30 : f32
    %277 = vector.broadcast %cst_119 : f32 to vector<8x128xf32>
    %278 = arith.select %275, %277, %276 : vector<8x128xi1>, vector<8x128xf32>
    %c2_i32_120 = arith.constant 2 : i32
    %279 = vector.broadcast %c2_i32_120 : i32 to vector<8x128xi32>
    %280 = arith.cmpi slt, %60, %279 : vector<8x128xi32>
    %c2_i32_121 = arith.constant 2 : i32
    %281 = tpu.dynamic_rotate %273 by %c2_i32_121 dim 1 : vector<8x128xf32>, i32 -> vector<8x128xf32>
    %cst_122 = arith.constant -1.000000e+30 : f32
    %282 = vector.broadcast %cst_122 : f32 to vector<8x128xf32>
    %283 = arith.select %280, %282, %281 : vector<8x128xi1>, vector<8x128xf32>
    %284 = arith.addf %283, %72 : vector<8x128xf32>
    %285 = arith.maximumf %273, %278 : vector<8x128xf32>
    %286 = arith.maximumf %285, %284 : vector<8x128xf32>
    %287 = arith.subf %273, %286 : vector<8x128xf32>
    %288 = math.exp %287 : vector<8x128xf32>
    %289 = arith.subf %278, %286 : vector<8x128xf32>
    %290 = math.exp %289 : vector<8x128xf32>
    %291 = arith.addf %288, %290 : vector<8x128xf32>
    %292 = arith.subf %284, %286 : vector<8x128xf32>
    %293 = math.exp %292 : vector<8x128xf32>
    %294 = arith.addf %291, %293 : vector<8x128xf32>
    %295 = arith.index_cast %c7_i32 : i32 to index
    %c0_123 = arith.constant 0 : index
    %c0_124 = arith.constant 0 : index
    %296 = vector.load %arg5[%295, %c0_123, %c0_124] : memref<8x8x128xf32, #tpu.memory_space<vmem>>, vector<1x8x128xf32>
    %297 = vector.shape_cast %296 : vector<1x8x128xf32> to vector<8x128xf32>
    %298 = arith.addf %297, %286 : vector<8x128xf32>
    %299 = math.log %294 : vector<8x128xf32>
    %300 = arith.addf %298, %299 : vector<8x128xf32>
    %c0_125 = arith.constant 0 : index
    %c0_126 = arith.constant 0 : index
    %301 = vector.load %arg6[%c0_125, %c0_126] : memref<8x128xf32, #tpu.memory_space<vmem>>, vector<8x128xf32>
    tpu.vector_store %arg6[%c0_125, %c0_126], %300 {strides = array<i32>} : memref<8x128xf32, #tpu.memory_space<vmem>>, vector<8x128xf32>,
    %c7_i32_127 = arith.constant 7 : i32
    %c0_128 = arith.constant 0 : index
    %c0_129 = arith.constant 0 : index
    %302 = vector.load %arg6[%c0_128, %c0_129] : memref<8x128xf32, #tpu.memory_space<vmem>>, vector<8x128xf32>
    %303 = arith.addf %302, %89 : vector<8x128xf32>
    %cst_130 = arith.constant dense<0xFF800000> : vector<8xf32>
    %304 = vector.multi_reduction <maximumf>, %303, %cst_130 [1] : vector<8x128xf32> to vector<8xf32>
    %305 = vector.shape_cast %304 : vector<8xf32> to vector<8x1xf32>
    %306 = vector.broadcast %305 : vector<8x1xf32> to vector<8x128xf32>
    %307 = arith.subf %303, %306 : vector<8x128xf32>
    %308 = math.exp %307 : vector<8x128xf32>
    %cst_131 = arith.constant dense<0.000000e+00> : vector<8xf32>
    %309 = vector.multi_reduction <add>, %308, %cst_131 [1] : vector<8x128xf32> to vector<8xf32>
    %310 = vector.shape_cast %309 : vector<8xf32> to vector<8x1xf32>
    %311 = math.log %310 : vector<8x1xf32>
    %312 = arith.addf %305, %311 : vector<8x1xf32>
    %cst_132 = arith.constant 0.000000e+00 : f32
    %313 = vector.broadcast %cst_132 : f32 to vector<8x1xf32>
    %314 = arith.subf %313, %312 : vector<8x1xf32>
    %315 = vector.shape_cast %314 : vector<8x1xf32> to vector<8x1xf32>
    %316 = vector.broadcast %315 : vector<8x1xf32> to vector<8x128xf32>
    %c0_133 = arith.constant 0 : index
    %c0_134 = arith.constant 0 : index
    %317 = vector.load %arg4[%c0_133, %c0_134] : memref<8x128xf32, #tpu.memory_space<vmem>>, vector<8x128xf32>
    tpu.vector_store %arg4[%c0_133, %c0_134], %316 {strides = array<i32>} : memref<8x128xf32, #tpu.memory_space<vmem>>, vector<8x128xf32>,
    return
  }
  func.func @transform_0(%arg0: i32) -> (i32, i32, i32) {
    %c0_i32 = arith.constant 0 : i32
    %c0_i32_0 = arith.constant 0 : i32
    %c0_i32_1 = arith.constant 0 : i32
    return %arg0, %c0_i32, %c0_i32_0 : i32, i32, i32
  }
  func.func @transform_1(%arg0: i32) -> (i32, i32) {
    %c0_i32 = arith.constant 0 : i32
    %c0_i32_0 = arith.constant 0 : i32
    return %arg0, %c0_i32 : i32, i32
  }
  func.func @transform_2(%arg0: i32) -> (i32, i32) {
    %c0_i32 = arith.constant 0 : i32
    %c0_i32_0 = arith.constant 0 : i32
    return %arg0, %c0_i32 : i32, i32
  }
  func.func @transform_3(%arg0: i32) -> (i32, i32) {
    %c0_i32 = arith.constant 0 : i32
    %c0_i32_0 = arith.constant 0 : i32
    return %arg0, %c0_i32 : i32, i32
  }
}

</mosaic_0001>

<llo_original>
// kernel: tpu_custom_call.1
$region0: #{tpu_custom_call.1}
  #allocation0 [shape = 'u32[]', space=smem, size = 0x4, offset = 0x4, fixed_abs, tag = 'smem constant byte address 0x4 - core index']
  #allocation1 [shape = 'u32[72,128]{1,0:T(1,128)}', space=vmem, size = 0x9000, scoped, tag = 'internal scratch']
  #allocation2 [shape = 'f32[8,8,128]{2,1,0:T(8,128)}', space=vmem, size = 0x8000, scoped, tag = 'scratch operand']
  #allocation3 [shape = 'f32[8,128]{1,0:T(8,128)}', space=vmem, size = 0x1000, scoped, tag = 'scratch operand']
  %s0 = inlined_call_operand.hbm [shape: f32[8,8,37], index: 0, kind: input, shape index: {}]
  %s1 = inlined_call_operand.vmem [shape: s32[8,128], index: 1, kind: input, shape index: {}]
  %s2 = inlined_call_operand.vmem [shape: s32[8,1], index: 2, kind: input, shape index: {}]
  %s3 = inlined_call_operand.hbm [shape: f32[8,128], index: 3, kind: output, shape index: {}]
  %s4 = sld [smem:[#allocation0]]
  $region26: #{tpu_custom_call.1} parent=0
    _
  %s6 = ssub.s32 1, %s4
  %s7 = scalar_select 0, %s6, %s4
  $region1: #{tpu_custom_call.1} parent=0
    #allocation4 [shape = 'u8[32768]{0}', space=vmem, size = 0x8000, scoped, tag = 'input window, operand 0, single buffered']
    #allocation5 [shape = 's32[1]{0}', space=sflag, size = 0x4, scoped, tag = 'scoped memory for tpu_custom_call.1']
    #allocation6 [shape = 's32[1]{0}', space=sflag, size = 0x4, scoped, tag = 'scoped memory for tpu_custom_call.1']
    #allocation7 [shape = 'u8[4096]{0}', space=vmem, size = 0x1000, scoped, tag = 'output window, operand 0, single buffered']
    %8 = vsyncpa [#allocation5], 0
    %9 = vsyncpa [#allocation6], 0
    // Predicated region
    $region2: #{tpu_custom_call.1} parent=1 // pred_check
      _
    $region3: #{tpu_custom_call.1} parent=1 // pred_check_branch
      %11 = sbr.rel (0) target = $region5
    $region4: #{tpu_custom_call.1} parent=1 // pred_region
      %13 = vsyncadd [#allocation5], 0
      %s14 = sshll.u32 %s0, 4
      %s15 = int_to_ptr.hbm [resolvable:$true] %s14
      %s16 = sshll.u32 [#allocation4], 4
      %s17 = int_to_ptr.vmem [resolvable:$true] %s16
      %22 = dma.hbm_to_vmem [thread:$0]  %s15, 1024, %s17, [#allocation5], 128, 128, 8
    $region5: #{tpu_custom_call.1} parent=1 // pred_fallthru
      _
    // Predicated region
    $region6: #{tpu_custom_call.1} parent=1 // pred_check
      _
    $region7: #{tpu_custom_call.1} parent=1 // pred_check_branch
      %24 = sbr.rel (0) target = $region9
    $region8: #{tpu_custom_call.1} parent=1 // pred_region
      _
    $region9: #{tpu_custom_call.1} parent=1 // pred_fallthru
      _
    // Predicated region
    $region10: #{tpu_custom_call.1} parent=1 // pred_check
      _
    $region11: #{tpu_custom_call.1} parent=1 // pred_check_branch
      %26 = sbr.rel (0) target = $region13
    $region12: #{tpu_custom_call.1} parent=1 // pred_region
      _
    $region13: #{tpu_custom_call.1} parent=1 // pred_fallthru
      _
    // Predicated region
    $region14: #{tpu_custom_call.1} parent=1 // pred_check
      _
    $region15: #{tpu_custom_call.1} parent=1 // pred_check_branch
      %28 = sbr.rel (0) target = $region17
    $region16: #{tpu_custom_call.1} parent=1 // pred_region
      %30 = dma.done [#allocation5], 1024
    $region17: #{tpu_custom_call.1} parent=1 // pred_fallthru
      _
    %v31 = vld [vmem:[#allocation4] sm:$0xff]
    %v32 = vld [vmem:[#allocation4 + $0x8] sm:$0xff]
    %v33 = vld [vmem:[#allocation4 + $0x10] sm:$0xff]
    %v34 = vld [vmem:[#allocation4 + $0x18] sm:$0xff]
    %v35 = vld [vmem:[#allocation4 + $0x20] sm:$0xff]
    %v36 = vld [vmem:[#allocation4 + $0x28] sm:$0xff]
    %v37 = vld [vmem:[#allocation4 + $0x30] sm:$0xff]
    %v38 = vld [vmem:[#allocation4 + $0x38] sm:$0xff]
    %vm39 = vcmask 302080
    %v40 = vsel %vm39, %v31, -inf
    %41 = vmax.xlane.f32.xlu0 %v40
    %v42 = vpop.xlane.xlu0 %41
    %v43 = vsel %vm39, %v32, -inf
    %44 = vmax.xlane.f32.xlu0 %v43
    %v45 = vpop.xlane.xlu0 %44
    %v46 = vsel %vm39, %v33, -inf
    %47 = vmax.xlane.f32.xlu0 %v46
    %v48 = vpop.xlane.xlu0 %47
    %v49 = vsel %vm39, %v34, -inf
    %50 = vmax.xlane.f32.xlu0 %v49
    %v51 = vpop.xlane.xlu0 %50
    %v52 = vsel %vm39, %v35, -inf
    %53 = vmax.xlane.f32.xlu0 %v52
    %v54 = vpop.xlane.xlu0 %53
    %v55 = vsel %vm39, %v36, -inf
    %56 = vmax.xlane.f32.xlu0 %v55
    %v57 = vpop.xlane.xlu0 %56
    %v58 = vsel %vm39, %v37, -inf
    %59 = vmax.xlane.f32.xlu0 %v58
    %v60 = vpop.xlane.xlu0 %59
    %v61 = vsel %vm39, %v38, -inf
    %62 = vmax.xlane.f32.xlu0 %v61
    %v63 = vpop.xlane.xlu0 %62
    %v64 = vsub.f32 %v31, %v42
    %v65 = vsub.f32 %v32, %v45
    %v66 = vsub.f32 %v33, %v48
    %v67 = vsub.f32 %v34, %v51
    %v68 = vsub.f32 %v35, %v54
    %v69 = vsub.f32 %v36, %v57
    %v70 = vsub.f32 %v37, %v60
    %v71 = vsub.f32 %v38, %v63
    %v72 = vmul.f32 %v64, 1.442695
    %v73 = vpow.pop %v72
    %v74 = vmul.f32 %v65, 1.442695
    %v75 = vpow.pop %v74
    %v76 = vmul.f32 %v66, 1.442695
    %v77 = vpow.pop %v76
    %v78 = vmul.f32 %v67, 1.442695
    %v79 = vpow.pop %v78
    %v80 = vmul.f32 %v68, 1.442695
    %v81 = vpow.pop %v80
    %v82 = vmul.f32 %v69, 1.442695
    %v83 = vpow.pop %v82
    %v84 = vmul.f32 %v70, 1.442695
    %v85 = vpow.pop %v84
    %v86 = vmul.f32 %v71, 1.442695
    %v87 = vpow.pop %v86
    %v88 = vsel %vm39, %v73, 0.0
    %89 = vadd.xlane.f32.xlu0 %v88
    %v90 = vpop.xlane.xlu0 %89
    %v91 = vsel %vm39, %v75, 0.0
    %92 = vadd.xlane.f32.xlu0 %v91
    %v93 = vpop.xlane.xlu0 %92
    %v94 = vsel %vm39, %v77, 0.0
    %95 = vadd.xlane.f32.xlu0 %v94
    %v96 = vpop.xlane.xlu0 %95
    %v97 = vsel %vm39, %v79, 0.0
    %98 = vadd.xlane.f32.xlu0 %v97
    %v99 = vpop.xlane.xlu0 %98
    %v100 = vsel %vm39, %v81, 0.0
    %101 = vadd.xlane.f32.xlu0 %v100
    %v102 = vpop.xlane.xlu0 %101
    %v103 = vsel %vm39, %v83, 0.0
    %104 = vadd.xlane.f32.xlu0 %v103
    %v105 = vpop.xlane.xlu0 %104
    %v106 = vsel %vm39, %v85, 0.0
    %107 = vadd.xlane.f32.xlu0 %v106
    %v108 = vpop.xlane.xlu0 %107
    %v109 = vsel %vm39, %v87, 0.0
    %110 = vadd.xlane.f32.xlu0 %v109
    %v111 = vpop.xlane.xlu0 %110
    %v112 = vlog2.pop %v90
    %v113 = vmul.f32 %v112, 0.6931472
    %v114 = vlog2.pop %v93
    %v115 = vmul.f32 %v114, 0.6931472
    %v116 = vlog2.pop %v96
    %v117 = vmul.f32 %v116, 0.6931472
    %v118 = vlog2.pop %v99
    %v119 = vmul.f32 %v118, 0.6931472
    %v120 = vlog2.pop %v102
    %v121 = vmul.f32 %v120, 0.6931472
    %v122 = vlog2.pop %v105
    %v123 = vmul.f32 %v122, 0.6931472
    %v124 = vlog2.pop %v108
    %v125 = vmul.f32 %v124, 0.6931472
    %v126 = vlog2.pop %v111
    %v127 = vmul.f32 %v126, 0.6931472
    %v128 = vadd.f32 %v113, %v42
    %v129 = vadd.f32 %v115, %v45
    %v130 = vadd.f32 %v117, %v48
    %v131 = vadd.f32 %v119, %v51
    %v132 = vadd.f32 %v121, %v54
    %v133 = vadd.f32 %v123, %v57
    %v134 = vadd.f32 %v125, %v60
    %v135 = vadd.f32 %v127, %v63
    %v136 = vsub.f32 %v31, %v128
    %v137 = vsub.f32 %v32, %v129
    %v138 = vsub.f32 %v33, %v130
    %v139 = vsub.f32 %v34, %v131
    %v140 = vsub.f32 %v35, %v132
    %v141 = vsub.f32 %v36, %v133
    %v142 = vsub.f32 %v37, %v134
    %v143 = vsub.f32 %v38, %v135
    %v144 = vld [vmem:[%s1] sm:$0xff]
    %v145 = vlaneseq
    %v146 = vshrl.u32 %v145, 7
    %v147 = vadd.s32 %v146, 8
    %v148 = vadd.s32 %v146, 16
    %v149 = vadd.s32 %v146, 24
    %v150 = vadd.s32 %v146, 32
    %v151 = vrot.slane %v144, 1
    %v152 = vrot.slane %v144, 2
    %v153 = vrot.slane %v144, 3
    %v154 = vrot.slane %v144, 4
    %v155 = vrot.slane %v144, 5
    %v156 = vrot.slane %v144, 6
    %v157 = vrot.slane %v144, 7
    %v158 = vperm.slane %v144, 0
    %v159 = vperm.slane %v151, 0
    %v160 = vperm.slane %v152, 0
    %v161 = vperm.slane %v153, 0
    %v162 = vperm.slane %v154, 0
    %v163 = vperm.slane %v155, 0
    %v164 = vperm.slane %v156, 0
    %v165 = vperm.slane %v157, 0
    %vm166 = vcmp.eq.s32.totalorder %v146, %v158
    %vm167 = vcmp.eq.s32.totalorder %v147, %v158
    %vm168 = vcmp.eq.s32.totalorder %v148, %v158
    %vm169 = vcmp.eq.s32.totalorder %v149, %v158
    %vm170 = vcmp.eq.s32.totalorder %v150, %v158
    %vm171 = vcmp.eq.s32.totalorder %v146, %v159
    %vm172 = vcmp.eq.s32.totalorder %v147, %v159
    %vm173 = vcmp.eq.s32.totalorder %v148, %v159
    %vm174 = vcmp.eq.s32.totalorder %v149, %v159
    %vm175 = vcmp.eq.s32.totalorder %v150, %v159
    %vm176 = vcmp.eq.s32.totalorder %v146, %v160
    %vm177 = vcmp.eq.s32.totalorder %v147, %v160
    %vm178 = vcmp.eq.s32.totalorder %v148, %v160
    %vm179 = vcmp.eq.s32.totalorder %v149, %v160
    %vm180 = vcmp.eq.s32.totalorder %v150, %v160
    %vm181 = vcmp.eq.s32.totalorder %v146, %v161
    %vm182 = vcmp.eq.s32.totalorder %v147, %v161
    %vm183 = vcmp.eq.s32.totalorder %v148, %v161
    %vm184 = vcmp.eq.s32.totalorder %v149, %v161
    %vm185 = vcmp.eq.s32.totalorder %v150, %v161
    %vm186 = vcmp.eq.s32.totalorder %v146, %v162
    %vm187 = vcmp.eq.s32.totalorder %v147, %v162
    %vm188 = vcmp.eq.s32.totalorder %v148, %v162
    %vm189 = vcmp.eq.s32.totalorder %v149, %v162
    %vm190 = vcmp.eq.s32.totalorder %v150, %v162
    %vm191 = vcmp.eq.s32.totalorder %v146, %v163
    %vm192 = vcmp.eq.s32.totalorder %v147, %v163
    %vm193 = vcmp.eq.s32.totalorder %v148, %v163
    %vm194 = vcmp.eq.s32.totalorder %v149, %v163
    %vm195 = vcmp.eq.s32.totalorder %v150, %v163
    %vm196 = vcmp.eq.s32.totalorder %v146, %v164
    %vm197 = vcmp.eq.s32.totalorder %v147, %v164
    %vm198 = vcmp.eq.s32.totalorder %v148, %v164
    %vm199 = vcmp.eq.s32.totalorder %v149, %v164
    %vm200 = vcmp.eq.s32.totalorder %v150, %v164
    %vm201 = vcmp.eq.s32.totalorder %v146, %v165
    %vm202 = vcmp.eq.s32.totalorder %v147, %v165
    %vm203 = vcmp.eq.s32.totalorder %v148, %v165
    %vm204 = vcmp.eq.s32.totalorder %v149, %v165
    %vm205 = vcmp.eq.s32.totalorder %v150, %v165
    %v206 = vsel %vm166, 1, 0
    %v207 = vsel %vm167, 1, 0
    %v208 = vsel %vm168, 1, 0
    %v209 = vsel %vm169, 1, 0
    %v210 = vsel %vm170, 1, 0
    %v211 = vsel %vm171, 1, 0
    %v212 = vsel %vm172, 1, 0
    %v213 = vsel %vm173, 1, 0
    %v214 = vsel %vm174, 1, 0
    %v215 = vsel %vm175, 1, 0
    %v216 = vsel %vm176, 1, 0
    %v217 = vsel %vm177, 1, 0
    %v218 = vsel %vm178, 1, 0
    %v219 = vsel %vm179, 1, 0
    %v220 = vsel %vm180, 1, 0
    %v221 = vsel %vm181, 1, 0
    %v222 = vsel %vm182, 1, 0
    %v223 = vsel %vm183, 1, 0
    %v224 = vsel %vm184, 1, 0
    %v225 = vsel %vm185, 1, 0
    %v226 = vsel %vm186, 1, 0
    %v227 = vsel %vm187, 1, 0
    %v228 = vsel %vm188, 1, 0
    %v229 = vsel %vm189, 1, 0
    %v230 = vsel %vm190, 1, 0
    %v231 = vsel %vm191, 1, 0
    %v232 = vsel %vm192, 1, 0
    %v233 = vsel %vm193, 1, 0
    %v234 = vsel %vm194, 1, 0
    %v235 = vsel %vm195, 1, 0
    %v236 = vsel %vm196, 1, 0
    %v237 = vsel %vm197, 1, 0
    %v238 = vsel %vm198, 1, 0
    %v239 = vsel %vm199, 1, 0
    %v240 = vsel %vm200, 1, 0
    %v241 = vsel %vm201, 1, 0
    %v242 = vsel %vm202, 1, 0
    %v243 = vsel %vm203, 1, 0
    %v244 = vsel %vm204, 1, 0
    %v245 = vsel %vm205, 1, 0
    %v246 = vcvt.s32.f32 %v206
    %v247 = vcvt.s32.f32 %v207
    %v248 = vcvt.s32.f32 %v208
    %v249 = vcvt.s32.f32 %v209
    %v250 = vcvt.s32.f32 %v210
    %v251 = vcvt.s32.f32 %v211
    %v252 = vcvt.s32.f32 %v212
    %v253 = vcvt.s32.f32 %v213
    %v254 = vcvt.s32.f32 %v214
    %v255 = vcvt.s32.f32 %v215
    %v256 = vcvt.s32.f32 %v216
    %v257 = vcvt.s32.f32 %v217
    %v258 = vcvt.s32.f32 %v218
    %v259 = vcvt.s32.f32 %v219
    %v260 = vcvt.s32.f32 %v220
    %v261 = vcvt.s32.f32 %v221
    %v262 = vcvt.s32.f32 %v222
    %v263 = vcvt.s32.f32 %v223
    %v264 = vcvt.s32.f32 %v224
    %v265 = vcvt.s32.f32 %v225
    %v266 = vcvt.s32.f32 %v226
    %v267 = vcvt.s32.f32 %v227
    %v268 = vcvt.s32.f32 %v228
    %v269 = vcvt.s32.f32 %v229
    %v270 = vcvt.s32.f32 %v230
    %v271 = vcvt.s32.f32 %v231
    %v272 = vcvt.s32.f32 %v232
    %v273 = vcvt.s32.f32 %v233
    %v274 = vcvt.s32.f32 %v234
    %v275 = vcvt.s32.f32 %v235
    %v276 = vcvt.s32.f32 %v236
    %v277 = vcvt.s32.f32 %v237
    %v278 = vcvt.s32.f32 %v238
    %v279 = vcvt.s32.f32 %v239
    %v280 = vcvt.s32.f32 %v240
    %v281 = vcvt.s32.f32 %v241
    %v282 = vcvt.s32.f32 %v242
    %v283 = vcvt.s32.f32 %v243
    %v284 = vcvt.s32.f32 %v244
    %v285 = vcvt.s32.f32 %v245
    %v287 = vsel %vm39, %v136, 0
    %vm289 = vcmask 1044480
    %v291 = vsel %vm289, %v250, 0
    %293 = vmatpush.msra.mxu0 0.0
    %294 = vmatpush.msra.mxu0 0.0
    %295 = vmatpush.msra.mxu0 0.0
    %296 = vmatpush.msra.mxu0 0.0
    %297 = vmatpush.msra.mxu0 0.0
    %298 = vmatpush.msra.mxu0 0.0
    %299 = vmatpush.msra.mxu0 0.0
    %300 = vmatpush.msra.mxu0 0.0
    %301 = vmatpush.msra.mxu0 0.0
    %302 = vmatpush.msra.mxu0 0.0
    %303 = vmatpush.msra.mxu0 0.0
    %v304 = vand.u32 %v291, 4294901760
    %305 = vmatpush.msra.mxu0 %v304
    %v306 = vand.u32 %v249, 4294901760
    %307 = vmatpush.msra.mxu0 %v306
    %v308 = vand.u32 %v248, 4294901760
    %309 = vmatpush.msra.mxu0 %v308
    %v310 = vand.u32 %v247, 4294901760
    %311 = vmatpush.msra.mxu0 %v310
    %v312 = vand.u32 %v246, 4294901760
    %313 = vmatpush.msra.mxu0 %v312
    %v314 = vand.u32 %v287, 4294901760
    %v315 = vsub.f32 %v287, %v314
    %v316 = vand.u32 %v315, 4294901760
    %v317 = vsub.f32 %v315, %v316
    %v318 = vand.u32 %v317, 4294901760
    %319 = vmatmul.f32.gmra.mxu0 %v318
    %v320 = vpop.f32.mrf.mxu0
    %v321 = vadd.f32 0.0, %v320
    %322 = vdwg.mxu0
    %323 = vmatpush.msra.mxu0 0.0
    %324 = vmatpush.msra.mxu0 0.0
    %325 = vmatpush.msra.mxu0 0.0
    %326 = vmatpush.msra.mxu0 0.0
    %327 = vmatpush.msra.mxu0 0.0
    %328 = vmatpush.msra.mxu0 0.0
    %329 = vmatpush.msra.mxu0 0.0
    %330 = vmatpush.msra.mxu0 0.0
    %331 = vmatpush.msra.mxu0 0.0
    %332 = vmatpush.msra.mxu0 0.0
    %333 = vmatpush.msra.mxu0 0.0
    %v334 = vand.u32 %v291, 4294901760
    %v335 = vsub.f32 %v291, %v334
    %v336 = vand.u32 %v335, 4294901760
    %v337 = vsub.f32 %v335, %v336
    %v338 = vand.u32 %v337, 4294901760
    %339 = vmatpush.msra.mxu0 %v338
    %v340 = vand.u32 %v249, 4294901760
    %v341 = vsub.f32 %v249, %v340
    %v342 = vand.u32 %v341, 4294901760
    %v343 = vsub.f32 %v341, %v342
    %v344 = vand.u32 %v343, 4294901760
    %345 = vmatpush.msra.mxu0 %v344
    %v346 = vand.u32 %v248, 4294901760
    %v347 = vsub.f32 %v248, %v346
    %v348 = vand.u32 %v347, 4294901760
    %v349 = vsub.f32 %v347, %v348
    %v350 = vand.u32 %v349, 4294901760
    %351 = vmatpush.msra.mxu0 %v350
    %v352 = vand.u32 %v247, 4294901760
    %v353 = vsub.f32 %v247, %v352
    %v354 = vand.u32 %v353, 4294901760
    %v355 = vsub.f32 %v353, %v354
    %v356 = vand.u32 %v355, 4294901760
    %357 = vmatpush.msra.mxu0 %v356
    %v358 = vand.u32 %v246, 4294901760
    %v359 = vsub.f32 %v246, %v358
    %v360 = vand.u32 %v359, 4294901760
    %v361 = vsub.f32 %v359, %v360
    %v362 = vand.u32 %v361, 4294901760
    %363 = vmatpush.msra.mxu0 %v362
    %v364 = vand.u32 %v287, 4294901760
    %365 = vmatmul.f32.gmra.mxu0 %v364
    %v366 = vpop.f32.mrf.mxu0
    %v367 = vadd.f32 %v321, %v366
    %368 = vdwg.mxu0
    %369 = vmatpush.msra.mxu0 0.0
    %370 = vmatpush.msra.mxu0 0.0
    %371 = vmatpush.msra.mxu0 0.0
    %372 = vmatpush.msra.mxu0 0.0
    %373 = vmatpush.msra.mxu0 0.0
    %374 = vmatpush.msra.mxu0 0.0
    %375 = vmatpush.msra.mxu0 0.0
    %376 = vmatpush.msra.mxu0 0.0
    %377 = vmatpush.msra.mxu0 0.0
    %378 = vmatpush.msra.mxu0 0.0
    %379 = vmatpush.msra.mxu0 0.0
    %v380 = vand.u32 %v291, 4294901760
    %v381 = vsub.f32 %v291, %v380
    %382 = vmatpush.msra.mxu0 %v381
    %v383 = vand.u32 %v249, 4294901760
    %v384 = vsub.f32 %v249, %v383
    %385 = vmatpush.msra.mxu0 %v384
    %v386 = vand.u32 %v248, 4294901760
    %v387 = vsub.f32 %v248, %v386
    %388 = vmatpush.msra.mxu0 %v387
    %v389 = vand.u32 %v247, 4294901760
    %v390 = vsub.f32 %v247, %v389
    %391 = vmatpush.msra.mxu0 %v390
    %v392 = vand.u32 %v246, 4294901760
    %v393 = vsub.f32 %v246, %v392
    %394 = vmatpush.msra.mxu0 %v393
    %v395 = vand.u32 %v287, 4294901760
    %v396 = vsub.f32 %v287, %v395
    %397 = vmatmul.f32.gmra.mxu0 %v396
    %v398 = vpop.f32.mrf.mxu0
    %v399 = vadd.f32 %v367, %v398
    %400 = vdwg.mxu0
    %401 = vmatpush.msra.mxu0 0.0
    %402 = vmatpush.msra.mxu0 0.0
    %403 = vmatpush.msra.mxu0 0.0
    %404 = vmatpush.msra.mxu0 0.0
    %405 = vmatpush.msra.mxu0 0.0
    %406 = vmatpush.msra.mxu0 0.0
    %407 = vmatpush.msra.mxu0 0.0
    %408 = vmatpush.msra.mxu0 0.0
    %409 = vmatpush.msra.mxu0 0.0
    %410 = vmatpush.msra.mxu0 0.0
    %411 = vmatpush.msra.mxu0 0.0
    %v412 = vand.u32 %v291, 4294901760
    %413 = vmatpush.msra.mxu0 %v412
    %v414 = vand.u32 %v249, 4294901760
    %415 = vmatpush.msra.mxu0 %v414
    %v416 = vand.u32 %v248, 4294901760
    %417 = vmatpush.msra.mxu0 %v416
    %v418 = vand.u32 %v247, 4294901760
    %419 = vmatpush.msra.mxu0 %v418
    %v420 = vand.u32 %v246, 4294901760
    %421 = vmatpush.msra.mxu0 %v420
    %v422 = vand.u32 %v287, 4294901760
    %v423 = vsub.f32 %v287, %v422
    %v424 = vand.u32 %v423, 4294901760
    %425 = vmatmul.f32.gmra.mxu0 %v424
    %v426 = vpop.f32.mrf.mxu0
    %v427 = vadd.f32 %v399, %v426
    %428 = vdwg.mxu0
    %429 = vmatpush.msra.mxu0 0.0
    %430 = vmatpush.msra.mxu0 0.0
    %431 = vmatpush.msra.mxu0 0.0
    %432 = vmatpush.msra.mxu0 0.0
    %433 = vmatpush.msra.mxu0 0.0
    %434 = vmatpush.msra.mxu0 0.0
    %435 = vmatpush.msra.mxu0 0.0
    %436 = vmatpush.msra.mxu0 0.0
    %437 = vmatpush.msra.mxu0 0.0
    %438 = vmatpush.msra.mxu0 0.0
    %439 = vmatpush.msra.mxu0 0.0
    %v440 = vand.u32 %v291, 4294901760
    %v441 = vsub.f32 %v291, %v440
    %v442 = vand.u32 %v441, 4294901760
    %443 = vmatpush.msra.mxu0 %v442
    %v444 = vand.u32 %v249, 4294901760
    %v445 = vsub.f32 %v249, %v444
    %v446 = vand.u32 %v445, 4294901760
    %447 = vmatpush.msra.mxu0 %v446
    %v448 = vand.u32 %v248, 4294901760
    %v449 = vsub.f32 %v248, %v448
    %v450 = vand.u32 %v449, 4294901760
    %451 = vmatpush.msra.mxu0 %v450
    %v452 = vand.u32 %v247, 4294901760
    %v453 = vsub.f32 %v247, %v452
    %v454 = vand.u32 %v453, 4294901760
    %455 = vmatpush.msra.mxu0 %v454
    %v456 = vand.u32 %v246, 4294901760
    %v457 = vsub.f32 %v246, %v456
    %v458 = vand.u32 %v457, 4294901760
    %459 = vmatpush.msra.mxu0 %v458
    %v460 = vand.u32 %v287, 4294901760
    %461 = vmatmul.f32.gmra.mxu0 %v460
    %v462 = vpop.f32.mrf.mxu0
    %v463 = vadd.f32 %v427, %v462
    %464 = vdwg.mxu0
    %465 = vmatpush.msra.mxu0 0.0
    %466 = vmatpush.msra.mxu0 0.0
    %467 = vmatpush.msra.mxu0 0.0
    %468 = vmatpush.msra.mxu0 0.0
    %469 = vmatpush.msra.mxu0 0.0
    %470 = vmatpush.msra.mxu0 0.0
    %471 = vmatpush.msra.mxu0 0.0
    %472 = vmatpush.msra.mxu0 0.0
    %473 = vmatpush.msra.mxu0 0.0
    %474 = vmatpush.msra.mxu0 0.0
    %475 = vmatpush.msra.mxu0 0.0
    %v476 = vand.u32 %v291, 4294901760
    %477 = vmatpush.msra.mxu0 %v476
    %v478 = vand.u32 %v249, 4294901760
    %479 = vmatpush.msra.mxu0 %v478
    %v480 = vand.u32 %v248, 4294901760
    %481 = vmatpush.msra.mxu0 %v480
    %v482 = vand.u32 %v247, 4294901760
    %483 = vmatpush.msra.mxu0 %v482
    %v484 = vand.u32 %v246, 4294901760
    %485 = vmatpush.msra.mxu0 %v484
    %v486 = vand.u32 %v287, 4294901760
    %487 = vmatmul.f32.gmra.mxu0 %v486
    %v488 = vpop.f32.mrf.mxu0
    %v489 = vadd.f32 %v463, %v488
    %490 = vdwg.mxu0
    %v492 = vsel %vm39, %v137, 0
    %v495 = vsel %vm289, %v255, 0
    %497 = vmatpush.msra.mxu0 0.0
    %498 = vmatpush.msra.mxu0 0.0
    %499 = vmatpush.msra.mxu0 0.0
    %500 = vmatpush.msra.mxu0 0.0
    %501 = vmatpush.msra.mxu0 0.0
    %502 = vmatpush.msra.mxu0 0.0
    %503 = vmatpush.msra.mxu0 0.0
    %504 = vmatpush.msra.mxu0 0.0
    %505 = vmatpush.msra.mxu0 0.0
    %506 = vmatpush.msra.mxu0 0.0
    %507 = vmatpush.msra.mxu0 0.0
    %v508 = vand.u32 %v495, 4294901760
    %509 = vmatpush.msra.mxu0 %v508
    %v510 = vand.u32 %v254, 4294901760
    %511 = vmatpush.msra.mxu0 %v510
    %v512 = vand.u32 %v253, 4294901760
    %513 = vmatpush.msra.mxu0 %v512
    %v514 = vand.u32 %v252, 4294901760
    %515 = vmatpush.msra.mxu0 %v514
    %v516 = vand.u32 %v251, 4294901760
    %517 = vmatpush.msra.mxu0 %v516
    %v518 = vand.u32 %v492, 4294901760
    %v519 = vsub.f32 %v492, %v518
    %v520 = vand.u32 %v519, 4294901760
    %v521 = vsub.f32 %v519, %v520
    %v522 = vand.u32 %v521, 4294901760
    %523 = vmatmul.f32.gmra.mxu0 %v522
    %v524 = vpop.f32.mrf.mxu0
    %v525 = vadd.f32 0.0, %v524
    %526 = vdwg.mxu0
    %527 = vmatpush.msra.mxu0 0.0
    %528 = vmatpush.msra.mxu0 0.0
    %529 = vmatpush.msra.mxu0 0.0
    %530 = vmatpush.msra.mxu0 0.0
    %531 = vmatpush.msra.mxu0 0.0
    %532 = vmatpush.msra.mxu0 0.0
    %533 = vmatpush.msra.mxu0 0.0
    %534 = vmatpush.msra.mxu0 0.0
    %535 = vmatpush.msra.mxu0 0.0
    %536 = vmatpush.msra.mxu0 0.0
    %537 = vmatpush.msra.mxu0 0.0
    %v538 = vand.u32 %v495, 4294901760
    %v539 = vsub.f32 %v495, %v538
    %v540 = vand.u32 %v539, 4294901760
    %v541 = vsub.f32 %v539, %v540
    %v542 = vand.u32 %v541, 4294901760
    %543 = vmatpush.msra.mxu0 %v542
    %v544 = vand.u32 %v254, 4294901760
    %v545 = vsub.f32 %v254, %v544
    %v546 = vand.u32 %v545, 4294901760
    %v547 = vsub.f32 %v545, %v546
    %v548 = vand.u32 %v547, 4294901760
    %549 = vmatpush.msra.mxu0 %v548
    %v550 = vand.u32 %v253, 4294901760
    %v551 = vsub.f32 %v253, %v550
    %v552 = vand.u32 %v551, 4294901760
    %v553 = vsub.f32 %v551, %v552
    %v554 = vand.u32 %v553, 4294901760
    %555 = vmatpush.msra.mxu0 %v554
    %v556 = vand.u32 %v252, 4294901760
    %v557 = vsub.f32 %v252, %v556
    %v558 = vand.u32 %v557, 4294901760
    %v559 = vsub.f32 %v557, %v558
    %v560 = vand.u32 %v559, 4294901760
    %561 = vmatpush.msra.mxu0 %v560
    %v562 = vand.u32 %v251, 4294901760
    %v563 = vsub.f32 %v251, %v562
    %v564 = vand.u32 %v563, 4294901760
    %v565 = vsub.f32 %v563, %v564
    %v566 = vand.u32 %v565, 4294901760
    %567 = vmatpush.msra.mxu0 %v566
    %v568 = vand.u32 %v492, 4294901760
    %569 = vmatmul.f32.gmra.mxu0 %v568
    %v570 = vpop.f32.mrf.mxu0
    %v571 = vadd.f32 %v525, %v570
    %572 = vdwg.mxu0
    %573 = vmatpush.msra.mxu0 0.0
    %574 = vmatpush.msra.mxu0 0.0
    %575 = vmatpush.msra.mxu0 0.0
    %576 = vmatpush.msra.mxu0 0.0
    %577 = vmatpush.msra.mxu0 0.0
    %578 = vmatpush.msra.mxu0 0.0
    %579 = vmatpush.msra.mxu0 0.0
    %580 = vmatpush.msra.mxu0 0.0
    %581 = vmatpush.msra.mxu0 0.0
    %582 = vmatpush.msra.mxu0 0.0
    %583 = vmatpush.msra.mxu0 0.0
    %v584 = vand.u32 %v495, 4294901760
    %v585 = vsub.f32 %v495, %v584
    %586 = vmatpush.msra.mxu0 %v585
    %v587 = vand.u32 %v254, 4294901760
    %v588 = vsub.f32 %v254, %v587
    %589 = vmatpush.msra.mxu0 %v588
    %v590 = vand.u32 %v253, 4294901760
    %v591 = vsub.f32 %v253, %v590
    %592 = vmatpush.msra.mxu0 %v591
    %v593 = vand.u32 %v252, 4294901760
    %v594 = vsub.f32 %v252, %v593
    %595 = vmatpush.msra.mxu0 %v594
    %v596 = vand.u32 %v251, 4294901760
    %v597 = vsub.f32 %v251, %v596
    %598 = vmatpush.msra.mxu0 %v597
    %v599 = vand.u32 %v492, 4294901760
    %v600 = vsub.f32 %v492, %v599
    %601 = vmatmul.f32.gmra.mxu0 %v600
    %v602 = vpop.f32.mrf.mxu0
    %v603 = vadd.f32 %v571, %v602
    %604 = vdwg.mxu0
    %605 = vmatpush.msra.mxu0 0.0
    %606 = vmatpush.msra.mxu0 0.0
    %607 = vmatpush.msra.mxu0 0.0
    %608 = vmatpush.msra.mxu0 0.0
    %609 = vmatpush.msra.mxu0 0.0
    %610 = vmatpush.msra.mxu0 0.0
    %611 = vmatpush.msra.mxu0 0.0
    %612 = vmatpush.msra.mxu0 0.0
    %613 = vmatpush.msra.mxu0 0.0
    %614 = vmatpush.msra.mxu0 0.0
    %615 = vmatpush.msra.mxu0 0.0
    %v616 = vand.u32 %v495, 4294901760
    %617 = vmatpush.msra.mxu0 %v616
    %v618 = vand.u32 %v254, 4294901760
    %619 = vmatpush.msra.mxu0 %v618
    %v620 = vand.u32 %v253, 4294901760
    %621 = vmatpush.msra.mxu0 %v620
    %v622 = vand.u32 %v252, 4294901760
    %623 = vmatpush.msra.mxu0 %v622
    %v624 = vand.u32 %v251, 4294901760
    %625 = vmatpush.msra.mxu0 %v624
    %v626 = vand.u32 %v492, 4294901760
    %v627 = vsub.f32 %v492, %v626
    %v628 = vand.u32 %v627, 4294901760
    %629 = vmatmul.f32.gmra.mxu0 %v628
    %v630 = vpop.f32.mrf.mxu0
    %v631 = vadd.f32 %v603, %v630
    %632 = vdwg.mxu0
    %633 = vmatpush.msra.mxu0 0.0
    %634 = vmatpush.msra.mxu0 0.0
    %635 = vmatpush.msra.mxu0 0.0
    %636 = vmatpush.msra.mxu0 0.0
    %637 = vmatpush.msra.mxu0 0.0
    %638 = vmatpush.msra.mxu0 0.0
    %639 = vmatpush.msra.mxu0 0.0
    %640 = vmatpush.msra.mxu0 0.0
    %641 = vmatpush.msra.mxu0 0.0
    %642 = vmatpush.msra.mxu0 0.0
    %643 = vmatpush.msra.mxu0 0.0
    %v644 = vand.u32 %v495, 4294901760
    %v645 = vsub.f32 %v495, %v644
    %v646 = vand.u32 %v645, 4294901760
    %647 = vmatpush.msra.mxu0 %v646
    %v648 = vand.u32 %v254, 4294901760
    %v649 = vsub.f32 %v254, %v648
    %v650 = vand.u32 %v649, 4294901760
    %651 = vmatpush.msra.mxu0 %v650
    %v652 = vand.u32 %v253, 4294901760
    %v653 = vsub.f32 %v253, %v652
    %v654 = vand.u32 %v653, 4294901760
    %655 = vmatpush.msra.mxu0 %v654
    %v656 = vand.u32 %v252, 4294901760
    %v657 = vsub.f32 %v252, %v656
    %v658 = vand.u32 %v657, 4294901760
    %659 = vmatpush.msra.mxu0 %v658
    %v660 = vand.u32 %v251, 4294901760
    %v661 = vsub.f32 %v251, %v660
    %v662 = vand.u32 %v661, 4294901760
    %663 = vmatpush.msra.mxu0 %v662
    %v664 = vand.u32 %v492, 4294901760
    %665 = vmatmul.f32.gmra.mxu0 %v664
    %v666 = vpop.f32.mrf.mxu0
    %v667 = vadd.f32 %v631, %v666
    %668 = vdwg.mxu0
    %669 = vmatpush.msra.mxu0 0.0
    %670 = vmatpush.msra.mxu0 0.0
    %671 = vmatpush.msra.mxu0 0.0
    %672 = vmatpush.msra.mxu0 0.0
    %673 = vmatpush.msra.mxu0 0.0
    %674 = vmatpush.msra.mxu0 0.0
    %675 = vmatpush.msra.mxu0 0.0
    %676 = vmatpush.msra.mxu0 0.0
    %677 = vmatpush.msra.mxu0 0.0
    %678 = vmatpush.msra.mxu0 0.0
    %679 = vmatpush.msra.mxu0 0.0
    %v680 = vand.u32 %v495, 4294901760
    %681 = vmatpush.msra.mxu0 %v680
    %v682 = vand.u32 %v254, 4294901760
    %683 = vmatpush.msra.mxu0 %v682
    %v684 = vand.u32 %v253, 4294901760
    %685 = vmatpush.msra.mxu0 %v684
    %v686 = vand.u32 %v252, 4294901760
    %687 = vmatpush.msra.mxu0 %v686
    %v688 = vand.u32 %v251, 4294901760
    %689 = vmatpush.msra.mxu0 %v688
    %v690 = vand.u32 %v492, 4294901760
    %691 = vmatmul.f32.gmra.mxu0 %v690
    %v692 = vpop.f32.mrf.mxu0
    %v693 = vadd.f32 %v667, %v692
    %694 = vdwg.mxu0
    %v696 = vsel %vm39, %v138, 0
    %v699 = vsel %vm289, %v260, 0
    %701 = vmatpush.msra.mxu0 0.0
    %702 = vmatpush.msra.mxu0 0.0
    %703 = vmatpush.msra.mxu0 0.0
    %704 = vmatpush.msra.mxu0 0.0
    %705 = vmatpush.msra.mxu0 0.0
    %706 = vmatpush.msra.mxu0 0.0
    %707 = vmatpush.msra.mxu0 0.0
    %708 = vmatpush.msra.mxu0 0.0
    %709 = vmatpush.msra.mxu0 0.0
    %710 = vmatpush.msra.mxu0 0.0
    %711 = vmatpush.msra.mxu0 0.0
    %v712 = vand.u32 %v699, 4294901760
    %713 = vmatpush.msra.mxu0 %v712
    %v714 = vand.u32 %v259, 4294901760
    %715 = vmatpush.msra.mxu0 %v714
    %v716 = vand.u32 %v258, 4294901760
    %717 = vmatpush.msra.mxu0 %v716
    %v718 = vand.u32 %v257, 4294901760
    %719 = vmatpush.msra.mxu0 %v718
    %v720 = vand.u32 %v256, 4294901760
    %721 = vmatpush.msra.mxu0 %v720
    %v722 = vand.u32 %v696, 4294901760
    %v723 = vsub.f32 %v696, %v722
    %v724 = vand.u32 %v723, 4294901760
    %v725 = vsub.f32 %v723, %v724
    %v726 = vand.u32 %v725, 4294901760
    %727 = vmatmul.f32.gmra.mxu0 %v726
    %v728 = vpop.f32.mrf.mxu0
    %v729 = vadd.f32 0.0, %v728
    %730 = vdwg.mxu0
    %731 = vmatpush.msra.mxu0 0.0
    %732 = vmatpush.msra.mxu0 0.0
    %733 = vmatpush.msra.mxu0 0.0
    %734 = vmatpush.msra.mxu0 0.0
    %735 = vmatpush.msra.mxu0 0.0
    %736 = vmatpush.msra.mxu0 0.0
    %737 = vmatpush.msra.mxu0 0.0
    %738 = vmatpush.msra.mxu0 0.0
    %739 = vmatpush.msra.mxu0 0.0
    %740 = vmatpush.msra.mxu0 0.0
    %741 = vmatpush.msra.mxu0 0.0
    %v742 = vand.u32 %v699, 4294901760
    %v743 = vsub.f32 %v699, %v742
    %v744 = vand.u32 %v743, 4294901760
    %v745 = vsub.f32 %v743, %v744
    %v746 = vand.u32 %v745, 4294901760
    %747 = vmatpush.msra.mxu0 %v746
    %v748 = vand.u32 %v259, 4294901760
    %v749 = vsub.f32 %v259, %v748
    %v750 = vand.u32 %v749, 4294901760
    %v751 = vsub.f32 %v749, %v750
    %v752 = vand.u32 %v751, 4294901760
    %753 = vmatpush.msra.mxu0 %v752
    %v754 = vand.u32 %v258, 4294901760
    %v755 = vsub.f32 %v258, %v754
    %v756 = vand.u32 %v755, 4294901760
    %v757 = vsub.f32 %v755, %v756
    %v758 = vand.u32 %v757, 4294901760
    %759 = vmatpush.msra.mxu0 %v758
    %v760 = vand.u32 %v257, 4294901760
    %v761 = vsub.f32 %v257, %v760
    %v762 = vand.u32 %v761, 4294901760
    %v763 = vsub.f32 %v761, %v762
    %v764 = vand.u32 %v763, 4294901760
    %765 = vmatpush.msra.mxu0 %v764
    %v766 = vand.u32 %v256, 4294901760
    %v767 = vsub.f32 %v256, %v766
    %v768 = vand.u32 %v767, 4294901760
    %v769 = vsub.f32 %v767, %v768
    %v770 = vand.u32 %v769, 4294901760
    %771 = vmatpush.msra.mxu0 %v770
    %v772 = vand.u32 %v696, 4294901760
    %773 = vmatmul.f32.gmra.mxu0 %v772
    %v774 = vpop.f32.mrf.mxu0
    %v775 = vadd.f32 %v729, %v774
    %776 = vdwg.mxu0
    %777 = vmatpush.msra.mxu0 0.0
    %778 = vmatpush.msra.mxu0 0.0
    %779 = vmatpush.msra.mxu0 0.0
    %780 = vmatpush.msra.mxu0 0.0
    %781 = vmatpush.msra.mxu0 0.0
    %782 = vmatpush.msra.mxu0 0.0
    %783 = vmatpush.msra.mxu0 0.0
    %784 = vmatpush.msra.mxu0 0.0
    %785 = vmatpush.msra.mxu0 0.0
    %786 = vmatpush.msra.mxu0 0.0
    %787 = vmatpush.msra.mxu0 0.0
    %v788 = vand.u32 %v699, 4294901760
    %v789 = vsub.f32 %v699, %v788
    %790 = vmatpush.msra.mxu0 %v789
    %v791 = vand.u32 %v259, 4294901760
    %v792 = vsub.f32 %v259, %v791
    %793 = vmatpush.msra.mxu0 %v792
    %v794 = vand.u32 %v258, 4294901760
    %v795 = vsub.f32 %v258, %v794
    %796 = vmatpush.msra.mxu0 %v795
    %v797 = vand.u32 %v257, 4294901760
    %v798 = vsub.f32 %v257, %v797
    %799 = vmatpush.msra.mxu0 %v798
    %v800 = vand.u32 %v256, 4294901760
    %v801 = vsub.f32 %v256, %v800
    %802 = vmatpush.msra.mxu0 %v801
    %v803 = vand.u32 %v696, 4294901760
    %v804 = vsub.f32 %v696, %v803
    %805 = vmatmul.f32.gmra.mxu0 %v804
    %v806 = vpop.f32.mrf.mxu0
    %v807 = vadd.f32 %v775, %v806
    %808 = vdwg.mxu0
    %809 = vmatpush.msra.mxu0 0.0
    %810 = vmatpush.msra.mxu0 0.0
    %811 = vmatpush.msra.mxu0 0.0
    %812 = vmatpush.msra.mxu0 0.0
    %813 = vmatpush.msra.mxu0 0.0
    %814 = vmatpush.msra.mxu0 0.0
    %815 = vmatpush.msra.mxu0 0.0
    %816 = vmatpush.msra.mxu0 0.0
    %817 = vmatpush.msra.mxu0 0.0
    %818 = vmatpush.msra.mxu0 0.0
    %819 = vmatpush.msra.mxu0 0.0
    %v820 = vand.u32 %v699, 4294901760
    %821 = vmatpush.msra.mxu0 %v820
    %v822 = vand.u32 %v259, 4294901760
    %823 = vmatpush.msra.mxu0 %v822
    %v824 = vand.u32 %v258, 4294901760
    %825 = vmatpush.msra.mxu0 %v824
    %v826 = vand.u32 %v257, 4294901760
    %827 = vmatpush.msra.mxu0 %v826
    %v828 = vand.u32 %v256, 4294901760
    %829 = vmatpush.msra.mxu0 %v828
    %v830 = vand.u32 %v696, 4294901760
    %v831 = vsub.f32 %v696, %v830
    %v832 = vand.u32 %v831, 4294901760
    %833 = vmatmul.f32.gmra.mxu0 %v832
    %v834 = vpop.f32.mrf.mxu0
    %v835 = vadd.f32 %v807, %v834
    %836 = vdwg.mxu0
    %837 = vmatpush.msra.mxu0 0.0
    %838 = vmatpush.msra.mxu0 0.0
    %839 = vmatpush.msra.mxu0 0.0
    %840 = vmatpush.msra.mxu0 0.0
    %841 = vmatpush.msra.mxu0 0.0
    %842 = vmatpush.msra.mxu0 0.0
    %843 = vmatpush.msra.mxu0 0.0
    %844 = vmatpush.msra.mxu0 0.0
    %845 = vmatpush.msra.mxu0 0.0
    %846 = vmatpush.msra.mxu0 0.0
    %847 = vmatpush.msra.mxu0 0.0
    %v848 = vand.u32 %v699, 4294901760
    %v849 = vsub.f32 %v699, %v848
    %v850 = vand.u32 %v849, 4294901760
    %851 = vmatpush.msra.mxu0 %v850
    %v852 = vand.u32 %v259, 4294901760
    %v853 = vsub.f32 %v259, %v852
    %v854 = vand.u32 %v853, 4294901760
    %855 = vmatpush.msra.mxu0 %v854
    %v856 = vand.u32 %v258, 4294901760
    %v857 = vsub.f32 %v258, %v856
    %v858 = vand.u32 %v857, 4294901760
    %859 = vmatpush.msra.mxu0 %v858
    %v860 = vand.u32 %v257, 4294901760
    %v861 = vsub.f32 %v257, %v860
    %v862 = vand.u32 %v861, 4294901760
    %863 = vmatpush.msra.mxu0 %v862
    %v864 = vand.u32 %v256, 4294901760
    %v865 = vsub.f32 %v256, %v864
    %v866 = vand.u32 %v865, 4294901760
    %867 = vmatpush.msra.mxu0 %v866
    %v868 = vand.u32 %v696, 4294901760
    %869 = vmatmul.f32.gmra.mxu0 %v868
    %v870 = vpop.f32.mrf.mxu0
    %v871 = vadd.f32 %v835, %v870
    %872 = vdwg.mxu0
    %873 = vmatpush.msra.mxu0 0.0
    %874 = vmatpush.msra.mxu0 0.0
    %875 = vmatpush.msra.mxu0 0.0
    %876 = vmatpush.msra.mxu0 0.0
    %877 = vmatpush.msra.mxu0 0.0
    %878 = vmatpush.msra.mxu0 0.0
    %879 = vmatpush.msra.mxu0 0.0
    %880 = vmatpush.msra.mxu0 0.0
    %881 = vmatpush.msra.mxu0 0.0
    %882 = vmatpush.msra.mxu0 0.0
    %883 = vmatpush.msra.mxu0 0.0
    %v884 = vand.u32 %v699, 4294901760
    %885 = vmatpush.msra.mxu0 %v884
    %v886 = vand.u32 %v259, 4294901760
    %887 = vmatpush.msra.mxu0 %v886
    %v888 = vand.u32 %v258, 4294901760
    %889 = vmatpush.msra.mxu0 %v888
    %v890 = vand.u32 %v257, 4294901760
    %891 = vmatpush.msra.mxu0 %v890
    %v892 = vand.u32 %v256, 4294901760
    %893 = vmatpush.msra.mxu0 %v892
    %v894 = vand.u32 %v696, 4294901760
    %895 = vmatmul.f32.gmra.mxu0 %v894
    %v896 = vpop.f32.mrf.mxu0
    %v897 = vadd.f32 %v871, %v896
    %898 = vdwg.mxu0
    %v900 = vsel %vm39, %v139, 0
    %v903 = vsel %vm289, %v265, 0
    %905 = vmatpush.msra.mxu0 0.0
    %906 = vmatpush.msra.mxu0 0.0
    %907 = vmatpush.msra.mxu0 0.0
    %908 = vmatpush.msra.mxu0 0.0
    %909 = vmatpush.msra.mxu0 0.0
    %910 = vmatpush.msra.mxu0 0.0
    %911 = vmatpush.msra.mxu0 0.0
    %912 = vmatpush.msra.mxu0 0.0
    %913 = vmatpush.msra.mxu0 0.0
    %914 = vmatpush.msra.mxu0 0.0
    %915 = vmatpush.msra.mxu0 0.0
    %v916 = vand.u32 %v903, 4294901760
    %917 = vmatpush.msra.mxu0 %v916
    %v918 = vand.u32 %v264, 4294901760
    %919 = vmatpush.msra.mxu0 %v918
    %v920 = vand.u32 %v263, 4294901760
    %921 = vmatpush.msra.mxu0 %v920
    %v922 = vand.u32 %v262, 4294901760
    %923 = vmatpush.msra.mxu0 %v922
    %v924 = vand.u32 %v261, 4294901760
    %925 = vmatpush.msra.mxu0 %v924
    %v926 = vand.u32 %v900, 4294901760
    %v927 = vsub.f32 %v900, %v926
    %v928 = vand.u32 %v927, 4294901760
    %v929 = vsub.f32 %v927, %v928
    %v930 = vand.u32 %v929, 4294901760
    %931 = vmatmul.f32.gmra.mxu0 %v930
    %v932 = vpop.f32.mrf.mxu0
    %v933 = vadd.f32 0.0, %v932
    %934 = vdwg.mxu0
    %935 = vmatpush.msra.mxu0 0.0
    %936 = vmatpush.msra.mxu0 0.0
    %937 = vmatpush.msra.mxu0 0.0
    %938 = vmatpush.msra.mxu0 0.0
    %939 = vmatpush.msra.mxu0 0.0
    %940 = vmatpush.msra.mxu0 0.0
    %941 = vmatpush.msra.mxu0 0.0
    %942 = vmatpush.msra.mxu0 0.0
    %943 = vmatpush.msra.mxu0 0.0
    %944 = vmatpush.msra.mxu0 0.0
    %945 = vmatpush.msra.mxu0 0.0
    %v946 = vand.u32 %v903, 4294901760
    %v947 = vsub.f32 %v903, %v946
    %v948 = vand.u32 %v947, 4294901760
    %v949 = vsub.f32 %v947, %v948
    %v950 = vand.u32 %v949, 4294901760
    %951 = vmatpush.msra.mxu0 %v950
    %v952 = vand.u32 %v264, 4294901760
    %v953 = vsub.f32 %v264, %v952
    %v954 = vand.u32 %v953, 4294901760
    %v955 = vsub.f32 %v953, %v954
    %v956 = vand.u32 %v955, 4294901760
    %957 = vmatpush.msra.mxu0 %v956
    %v958 = vand.u32 %v263, 4294901760
    %v959 = vsub.f32 %v263, %v958
    %v960 = vand.u32 %v959, 4294901760
    %v961 = vsub.f32 %v959, %v960
    %v962 = vand.u32 %v961, 4294901760
    %963 = vmatpush.msra.mxu0 %v962
    %v964 = vand.u32 %v262, 4294901760
    %v965 = vsub.f32 %v262, %v964
    %v966 = vand.u32 %v965, 4294901760
    %v967 = vsub.f32 %v965, %v966
    %v968 = vand.u32 %v967, 4294901760
    %969 = vmatpush.msra.mxu0 %v968
    %v970 = vand.u32 %v261, 4294901760
    %v971 = vsub.f32 %v261, %v970
    %v972 = vand.u32 %v971, 4294901760
    %v973 = vsub.f32 %v971, %v972
    %v974 = vand.u32 %v973, 4294901760
    %975 = vmatpush.msra.mxu0 %v974
    %v976 = vand.u32 %v900, 4294901760
    %977 = vmatmul.f32.gmra.mxu0 %v976
    %v978 = vpop.f32.mrf.mxu0
    %v979 = vadd.f32 %v933, %v978
    %980 = vdwg.mxu0
    %981 = vmatpush.msra.mxu0 0.0
    %982 = vmatpush.msra.mxu0 0.0
    %983 = vmatpush.msra.mxu0 0.0
    %984 = vmatpush.msra.mxu0 0.0
    %985 = vmatpush.msra.mxu0 0.0
    %986 = vmatpush.msra.mxu0 0.0
    %987 = vmatpush.msra.mxu0 0.0
    %988 = vmatpush.msra.mxu0 0.0
    %989 = vmatpush.msra.mxu0 0.0
    %990 = vmatpush.msra.mxu0 0.0
    %991 = vmatpush.msra.mxu0 0.0
    %v992 = vand.u32 %v903, 4294901760
    %v993 = vsub.f32 %v903, %v992
    %994 = vmatpush.msra.mxu0 %v993
    %v995 = vand.u32 %v264, 4294901760
    %v996 = vsub.f32 %v264, %v995
    %997 = vmatpush.msra.mxu0 %v996
    %v998 = vand.u32 %v263, 4294901760
    %v999 = vsub.f32 %v263, %v998
    %1000 = vmatpush.msra.mxu0 %v999
    %v1001 = vand.u32 %v262, 4294901760
    %v1002 = vsub.f32 %v262, %v1001
    %1003 = vmatpush.msra.mxu0 %v1002
    %v1004 = vand.u32 %v261, 4294901760
    %v1005 = vsub.f32 %v261, %v1004
    %1006 = vmatpush.msra.mxu0 %v1005
    %v1007 = vand.u32 %v900, 4294901760
    %v1008 = vsub.f32 %v900, %v1007
    %1009 = vmatmul.f32.gmra.mxu0 %v1008
    %v1010 = vpop.f32.mrf.mxu0
    %v1011 = vadd.f32 %v979, %v1010
    %1012 = vdwg.mxu0
    %1013 = vmatpush.msra.mxu0 0.0
    %1014 = vmatpush.msra.mxu0 0.0
    %1015 = vmatpush.msra.mxu0 0.0
    %1016 = vmatpush.msra.mxu0 0.0
    %1017 = vmatpush.msra.mxu0 0.0
    %1018 = vmatpush.msra.mxu0 0.0
    %1019 = vmatpush.msra.mxu0 0.0
    %1020 = vmatpush.msra.mxu0 0.0
    %1021 = vmatpush.msra.mxu0 0.0
    %1022 = vmatpush.msra.mxu0 0.0
    %1023 = vmatpush.msra.mxu0 0.0
    %v1024 = vand.u32 %v903, 4294901760
    %1025 = vmatpush.msra.mxu0 %v1024
    %v1026 = vand.u32 %v264, 4294901760
    %1027 = vmatpush.msra.mxu0 %v1026
    %v1028 = vand.u32 %v263, 4294901760
    %1029 = vmatpush.msra.mxu0 %v1028
    %v1030 = vand.u32 %v262, 4294901760
    %1031 = vmatpush.msra.mxu0 %v1030
    %v1032 = vand.u32 %v261, 4294901760
    %1033 = vmatpush.msra.mxu0 %v1032
    %v1034 = vand.u32 %v900, 4294901760
    %v1035 = vsub.f32 %v900, %v1034
    %v1036 = vand.u32 %v1035, 4294901760
    %1037 = vmatmul.f32.gmra.mxu0 %v1036
    %v1038 = vpop.f32.mrf.mxu0
    %v1039 = vadd.f32 %v1011, %v1038
    %1040 = vdwg.mxu0
    %1041 = vmatpush.msra.mxu0 0.0
    %1042 = vmatpush.msra.mxu0 0.0
    %1043 = vmatpush.msra.mxu0 0.0
    %1044 = vmatpush.msra.mxu0 0.0
    %1045 = vmatpush.msra.mxu0 0.0
    %1046 = vmatpush.msra.mxu0 0.0
    %1047 = vmatpush.msra.mxu0 0.0
    %1048 = vmatpush.msra.mxu0 0.0
    %1049 = vmatpush.msra.mxu0 0.0
    %1050 = vmatpush.msra.mxu0 0.0
    %1051 = vmatpush.msra.mxu0 0.0
    %v1052 = vand.u32 %v903, 4294901760
    %v1053 = vsub.f32 %v903, %v1052
    %v1054 = vand.u32 %v1053, 4294901760
    %1055 = vmatpush.msra.mxu0 %v1054
    %v1056 = vand.u32 %v264, 4294901760
    %v1057 = vsub.f32 %v264, %v1056
    %v1058 = vand.u32 %v1057, 4294901760
    %1059 = vmatpush.msra.mxu0 %v1058
    %v1060 = vand.u32 %v263, 4294901760
    %v1061 = vsub.f32 %v263, %v1060
    %v1062 = vand.u32 %v1061, 4294901760
    %1063 = vmatpush.msra.mxu0 %v1062
    %v1064 = vand.u32 %v262, 4294901760
    %v1065 = vsub.f32 %v262, %v1064
    %v1066 = vand.u32 %v1065, 4294901760
    %1067 = vmatpush.msra.mxu0 %v1066
    %v1068 = vand.u32 %v261, 4294901760
    %v1069 = vsub.f32 %v261, %v1068
    %v1070 = vand.u32 %v1069, 4294901760
    %1071 = vmatpush.msra.mxu0 %v1070
    %v1072 = vand.u32 %v900, 4294901760
    %1073 = vmatmul.f32.gmra.mxu0 %v1072
    %v1074 = vpop.f32.mrf.mxu0
    %v1075 = vadd.f32 %v1039, %v1074
    %1076 = vdwg.mxu0
    %1077 = vmatpush.msra.mxu0 0.0
    %1078 = vmatpush.msra.mxu0 0.0
    %1079 = vmatpush.msra.mxu0 0.0
    %1080 = vmatpush.msra.mxu0 0.0
    %1081 = vmatpush.msra.mxu0 0.0
    %1082 = vmatpush.msra.mxu0 0.0
    %1083 = vmatpush.msra.mxu0 0.0
    %1084 = vmatpush.msra.mxu0 0.0
    %1085 = vmatpush.msra.mxu0 0.0
    %1086 = vmatpush.msra.mxu0 0.0
    %1087 = vmatpush.msra.mxu0 0.0
    %v1088 = vand.u32 %v903, 4294901760
    %1089 = vmatpush.msra.mxu0 %v1088
    %v1090 = vand.u32 %v264, 4294901760
    %1091 = vmatpush.msra.mxu0 %v1090
    %v1092 = vand.u32 %v263, 4294901760
    %1093 = vmatpush.msra.mxu0 %v1092
    %v1094 = vand.u32 %v262, 4294901760
    %1095 = vmatpush.msra.mxu0 %v1094
    %v1096 = vand.u32 %v261, 4294901760
    %1097 = vmatpush.msra.mxu0 %v1096
    %v1098 = vand.u32 %v900, 4294901760
    %1099 = vmatmul.f32.gmra.mxu0 %v1098
    %v1100 = vpop.f32.mrf.mxu0
    %v1101 = vadd.f32 %v1075, %v1100
    %1102 = vdwg.mxu0
    %v1104 = vsel %vm39, %v140, 0
    %v1107 = vsel %vm289, %v270, 0
    %1109 = vmatpush.msra.mxu0 0.0
    %1110 = vmatpush.msra.mxu0 0.0
    %1111 = vmatpush.msra.mxu0 0.0
    %1112 = vmatpush.msra.mxu0 0.0
    %1113 = vmatpush.msra.mxu0 0.0
    %1114 = vmatpush.msra.mxu0 0.0
    %1115 = vmatpush.msra.mxu0 0.0
    %1116 = vmatpush.msra.mxu0 0.0
    %1117 = vmatpush.msra.mxu0 0.0
    %1118 = vmatpush.msra.mxu0 0.0
    %1119 = vmatpush.msra.mxu0 0.0
    %v1120 = vand.u32 %v1107, 4294901760
    %1121 = vmatpush.msra.mxu0 %v1120
    %v1122 = vand.u32 %v269, 4294901760
    %1123 = vmatpush.msra.mxu0 %v1122
    %v1124 = vand.u32 %v268, 4294901760
    %1125 = vmatpush.msra.mxu0 %v1124
    %v1126 = vand.u32 %v267, 4294901760
    %1127 = vmatpush.msra.mxu0 %v1126
    %v1128 = vand.u32 %v266, 4294901760
    %1129 = vmatpush.msra.mxu0 %v1128
    %v1130 = vand.u32 %v1104, 4294901760
    %v1131 = vsub.f32 %v1104, %v1130
    %v1132 = vand.u32 %v1131, 4294901760
    %v1133 = vsub.f32 %v1131, %v1132
    %v1134 = vand.u32 %v1133, 4294901760
    %1135 = vmatmul.f32.gmra.mxu0 %v1134
    %v1136 = vpop.f32.mrf.mxu0
    %v1137 = vadd.f32 0.0, %v1136
    %1138 = vdwg.mxu0
    %1139 = vmatpush.msra.mxu0 0.0
    %1140 = vmatpush.msra.mxu0 0.0
    %1141 = vmatpush.msra.mxu0 0.0
    %1142 = vmatpush.msra.mxu0 0.0
    %1143 = vmatpush.msra.mxu0 0.0
    %1144 = vmatpush.msra.mxu0 0.0
    %1145 = vmatpush.msra.mxu0 0.0
    %1146 = vmatpush.msra.mxu0 0.0
    %1147 = vmatpush.msra.mxu0 0.0
    %1148 = vmatpush.msra.mxu0 0.0
    %1149 = vmatpush.msra.mxu0 0.0
    %v1150 = vand.u32 %v1107, 4294901760
    %v1151 = vsub.f32 %v1107, %v1150
    %v1152 = vand.u32 %v1151, 4294901760
    %v1153 = vsub.f32 %v1151, %v1152
    %v1154 = vand.u32 %v1153, 4294901760
    %1155 = vmatpush.msra.mxu0 %v1154
    %v1156 = vand.u32 %v269, 4294901760
    %v1157 = vsub.f32 %v269, %v1156
    %v1158 = vand.u32 %v1157, 4294901760
    %v1159 = vsub.f32 %v1157, %v1158
    %v1160 = vand.u32 %v1159, 4294901760
    %1161 = vmatpush.msra.mxu0 %v1160
    %v1162 = vand.u32 %v268, 4294901760
    %v1163 = vsub.f32 %v268, %v1162
    %v1164 = vand.u32 %v1163, 4294901760
    %v1165 = vsub.f32 %v1163, %v1164
    %v1166 = vand.u32 %v1165, 4294901760
    %1167 = vmatpush.msra.mxu0 %v1166
    %v1168 = vand.u32 %v267, 4294901760
    %v1169 = vsub.f32 %v267, %v1168
    %v1170 = vand.u32 %v1169, 4294901760
    %v1171 = vsub.f32 %v1169, %v1170
    %v1172 = vand.u32 %v1171, 4294901760
    %1173 = vmatpush.msra.mxu0 %v1172
    %v1174 = vand.u32 %v266, 4294901760
    %v1175 = vsub.f32 %v266, %v1174
    %v1176 = vand.u32 %v1175, 4294901760
    %v1177 = vsub.f32 %v1175, %v1176
    %v1178 = vand.u32 %v1177, 4294901760
    %1179 = vmatpush.msra.mxu0 %v1178
    %v1180 = vand.u32 %v1104, 4294901760
    %1181 = vmatmul.f32.gmra.mxu0 %v1180
    %v1182 = vpop.f32.mrf.mxu0
    %v1183 = vadd.f32 %v1137, %v1182
    %1184 = vdwg.mxu0
    %1185 = vmatpush.msra.mxu0 0.0
    %1186 = vmatpush.msra.mxu0 0.0
    %1187 = vmatpush.msra.mxu0 0.0
    %1188 = vmatpush.msra.mxu0 0.0
    %1189 = vmatpush.msra.mxu0 0.0
    %1190 = vmatpush.msra.mxu0 0.0
    %1191 = vmatpush.msra.mxu0 0.0
    %1192 = vmatpush.msra.mxu0 0.0
    %1193 = vmatpush.msra.mxu0 0.0
    %1194 = vmatpush.msra.mxu0 0.0
    %1195 = vmatpush.msra.mxu0 0.0
    %v1196 = vand.u32 %v1107, 4294901760
    %v1197 = vsub.f32 %v1107, %v1196
    %1198 = vmatpush.msra.mxu0 %v1197
    %v1199 = vand.u32 %v269, 4294901760
    %v1200 = vsub.f32 %v269, %v1199
    %1201 = vmatpush.msra.mxu0 %v1200
    %v1202 = vand.u32 %v268, 4294901760
    %v1203 = vsub.f32 %v268, %v1202
    %1204 = vmatpush.msra.mxu0 %v1203
    %v1205 = vand.u32 %v267, 4294901760
    %v1206 = vsub.f32 %v267, %v1205
    %1207 = vmatpush.msra.mxu0 %v1206
    %v1208 = vand.u32 %v266, 4294901760
    %v1209 = vsub.f32 %v266, %v1208
    %1210 = vmatpush.msra.mxu0 %v1209
    %v1211 = vand.u32 %v1104, 4294901760
    %v1212 = vsub.f32 %v1104, %v1211
    %1213 = vmatmul.f32.gmra.mxu0 %v1212
    %v1214 = vpop.f32.mrf.mxu0
    %v1215 = vadd.f32 %v1183, %v1214
    %1216 = vdwg.mxu0
    %1217 = vmatpush.msra.mxu0 0.0
    %1218 = vmatpush.msra.mxu0 0.0
    %1219 = vmatpush.msra.mxu0 0.0
    %1220 = vmatpush.msra.mxu0 0.0
    %1221 = vmatpush.msra.mxu0 0.0
    %1222 = vmatpush.msra.mxu0 0.0
    %1223 = vmatpush.msra.mxu0 0.0
    %1224 = vmatpush.msra.mxu0 0.0
    %1225 = vmatpush.msra.mxu0 0.0
    %1226 = vmatpush.msra.mxu0 0.0
    %1227 = vmatpush.msra.mxu0 0.0
    %v1228 = vand.u32 %v1107, 4294901760
    %1229 = vmatpush.msra.mxu0 %v1228
    %v1230 = vand.u32 %v269, 4294901760
    %1231 = vmatpush.msra.mxu0 %v1230
    %v1232 = vand.u32 %v268, 4294901760
    %1233 = vmatpush.msra.mxu0 %v1232
    %v1234 = vand.u32 %v267, 4294901760
    %1235 = vmatpush.msra.mxu0 %v1234
    %v1236 = vand.u32 %v266, 4294901760
    %1237 = vmatpush.msra.mxu0 %v1236
    %v1238 = vand.u32 %v1104, 4294901760
    %v1239 = vsub.f32 %v1104, %v1238
    %v1240 = vand.u32 %v1239, 4294901760
    %1241 = vmatmul.f32.gmra.mxu0 %v1240
    %v1242 = vpop.f32.mrf.mxu0
    %v1243 = vadd.f32 %v1215, %v1242
    %1244 = vdwg.mxu0
    %1245 = vmatpush.msra.mxu0 0.0
    %1246 = vmatpush.msra.mxu0 0.0
    %1247 = vmatpush.msra.mxu0 0.0
    %1248 = vmatpush.msra.mxu0 0.0
    %1249 = vmatpush.msra.mxu0 0.0
    %1250 = vmatpush.msra.mxu0 0.0
    %1251 = vmatpush.msra.mxu0 0.0
    %1252 = vmatpush.msra.mxu0 0.0
    %1253 = vmatpush.msra.mxu0 0.0
    %1254 = vmatpush.msra.mxu0 0.0
    %1255 = vmatpush.msra.mxu0 0.0
    %v1256 = vand.u32 %v1107, 4294901760
    %v1257 = vsub.f32 %v1107, %v1256
    %v1258 = vand.u32 %v1257, 4294901760
    %1259 = vmatpush.msra.mxu0 %v1258
    %v1260 = vand.u32 %v269, 4294901760
    %v1261 = vsub.f32 %v269, %v1260
    %v1262 = vand.u32 %v1261, 4294901760
    %1263 = vmatpush.msra.mxu0 %v1262
    %v1264 = vand.u32 %v268, 4294901760
    %v1265 = vsub.f32 %v268, %v1264
    %v1266 = vand.u32 %v1265, 4294901760
    %1267 = vmatpush.msra.mxu0 %v1266
    %v1268 = vand.u32 %v267, 4294901760
    %v1269 = vsub.f32 %v267, %v1268
    %v1270 = vand.u32 %v1269, 4294901760
    %1271 = vmatpush.msra.mxu0 %v1270
    %v1272 = vand.u32 %v266, 4294901760
    %v1273 = vsub.f32 %v266, %v1272
    %v1274 = vand.u32 %v1273, 4294901760
    %1275 = vmatpush.msra.mxu0 %v1274
    %v1276 = vand.u32 %v1104, 4294901760
    %1277 = vmatmul.f32.gmra.mxu0 %v1276
    %v1278 = vpop.f32.mrf.mxu0
    %v1279 = vadd.f32 %v1243, %v1278
    %1280 = vdwg.mxu0
    %1281 = vmatpush.msra.mxu0 0.0
    %1282 = vmatpush.msra.mxu0 0.0
    %1283 = vmatpush.msra.mxu0 0.0
    %1284 = vmatpush.msra.mxu0 0.0
    %1285 = vmatpush.msra.mxu0 0.0
    %1286 = vmatpush.msra.mxu0 0.0
    %1287 = vmatpush.msra.mxu0 0.0
    %1288 = vmatpush.msra.mxu0 0.0
    %1289 = vmatpush.msra.mxu0 0.0
    %1290 = vmatpush.msra.mxu0 0.0
    %1291 = vmatpush.msra.mxu0 0.0
    %v1292 = vand.u32 %v1107, 4294901760
    %1293 = vmatpush.msra.mxu0 %v1292
    %v1294 = vand.u32 %v269, 4294901760
    %1295 = vmatpush.msra.mxu0 %v1294
    %v1296 = vand.u32 %v268, 4294901760
    %1297 = vmatpush.msra.mxu0 %v1296
    %v1298 = vand.u32 %v267, 4294901760
    %1299 = vmatpush.msra.mxu0 %v1298
    %v1300 = vand.u32 %v266, 4294901760
    %1301 = vmatpush.msra.mxu0 %v1300
    %v1302 = vand.u32 %v1104, 4294901760
    %1303 = vmatmul.f32.gmra.mxu0 %v1302
    %v1304 = vpop.f32.mrf.mxu0
    %v1305 = vadd.f32 %v1279, %v1304
    %1306 = vdwg.mxu0
    %v1308 = vsel %vm39, %v141, 0
    %v1311 = vsel %vm289, %v275, 0
    %1313 = vmatpush.msra.mxu0 0.0
    %1314 = vmatpush.msra.mxu0 0.0
    %1315 = vmatpush.msra.mxu0 0.0
    %1316 = vmatpush.msra.mxu0 0.0
    %1317 = vmatpush.msra.mxu0 0.0
    %1318 = vmatpush.msra.mxu0 0.0
    %1319 = vmatpush.msra.mxu0 0.0
    %1320 = vmatpush.msra.mxu0 0.0
    %1321 = vmatpush.msra.mxu0 0.0
    %1322 = vmatpush.msra.mxu0 0.0
    %1323 = vmatpush.msra.mxu0 0.0
    %v1324 = vand.u32 %v1311, 4294901760
    %1325 = vmatpush.msra.mxu0 %v1324
    %v1326 = vand.u32 %v274, 4294901760
    %1327 = vmatpush.msra.mxu0 %v1326
    %v1328 = vand.u32 %v273, 4294901760
    %1329 = vmatpush.msra.mxu0 %v1328
    %v1330 = vand.u32 %v272, 4294901760
    %1331 = vmatpush.msra.mxu0 %v1330
    %v1332 = vand.u32 %v271, 4294901760
    %1333 = vmatpush.msra.mxu0 %v1332
    %v1334 = vand.u32 %v1308, 4294901760
    %v1335 = vsub.f32 %v1308, %v1334
    %v1336 = vand.u32 %v1335, 4294901760
    %v1337 = vsub.f32 %v1335, %v1336
    %v1338 = vand.u32 %v1337, 4294901760
    %1339 = vmatmul.f32.gmra.mxu0 %v1338
    %v1340 = vpop.f32.mrf.mxu0
    %v1341 = vadd.f32 0.0, %v1340
    %1342 = vdwg.mxu0
    %1343 = vmatpush.msra.mxu0 0.0
    %1344 = vmatpush.msra.mxu0 0.0
    %1345 = vmatpush.msra.mxu0 0.0
    %1346 = vmatpush.msra.mxu0 0.0
    %1347 = vmatpush.msra.mxu0 0.0
    %1348 = vmatpush.msra.mxu0 0.0
    %1349 = vmatpush.msra.mxu0 0.0
    %1350 = vmatpush.msra.mxu0 0.0
    %1351 = vmatpush.msra.mxu0 0.0
    %1352 = vmatpush.msra.mxu0 0.0
    %1353 = vmatpush.msra.mxu0 0.0
    %v1354 = vand.u32 %v1311, 4294901760
    %v1355 = vsub.f32 %v1311, %v1354
    %v1356 = vand.u32 %v1355, 4294901760
    %v1357 = vsub.f32 %v1355, %v1356
    %v1358 = vand.u32 %v1357, 4294901760
    %1359 = vmatpush.msra.mxu0 %v1358
    %v1360 = vand.u32 %v274, 4294901760
    %v1361 = vsub.f32 %v274, %v1360
    %v1362 = vand.u32 %v1361, 4294901760
    %v1363 = vsub.f32 %v1361, %v1362
    %v1364 = vand.u32 %v1363, 4294901760
    %1365 = vmatpush.msra.mxu0 %v1364
    %v1366 = vand.u32 %v273, 4294901760
    %v1367 = vsub.f32 %v273, %v1366
    %v1368 = vand.u32 %v1367, 4294901760
    %v1369 = vsub.f32 %v1367, %v1368
    %v1370 = vand.u32 %v1369, 4294901760
    %1371 = vmatpush.msra.mxu0 %v1370
    %v1372 = vand.u32 %v272, 4294901760
    %v1373 = vsub.f32 %v272, %v1372
    %v1374 = vand.u32 %v1373, 4294901760
    %v1375 = vsub.f32 %v1373, %v1374
    %v1376 = vand.u32 %v1375, 4294901760
    %1377 = vmatpush.msra.mxu0 %v1376
    %v1378 = vand.u32 %v271, 4294901760
    %v1379 = vsub.f32 %v271, %v1378
    %v1380 = vand.u32 %v1379, 4294901760
    %v1381 = vsub.f32 %v1379, %v1380
    %v1382 = vand.u32 %v1381, 4294901760
    %1383 = vmatpush.msra.mxu0 %v1382
    %v1384 = vand.u32 %v1308, 4294901760
    %1385 = vmatmul.f32.gmra.mxu0 %v1384
    %v1386 = vpop.f32.mrf.mxu0
    %v1387 = vadd.f32 %v1341, %v1386
    %1388 = vdwg.mxu0
    %1389 = vmatpush.msra.mxu0 0.0
    %1390 = vmatpush.msra.mxu0 0.0
    %1391 = vmatpush.msra.mxu0 0.0
    %1392 = vmatpush.msra.mxu0 0.0
    %1393 = vmatpush.msra.mxu0 0.0
    %1394 = vmatpush.msra.mxu0 0.0
    %1395 = vmatpush.msra.mxu0 0.0
    %1396 = vmatpush.msra.mxu0 0.0
    %1397 = vmatpush.msra.mxu0 0.0
    %1398 = vmatpush.msra.mxu0 0.0
    %1399 = vmatpush.msra.mxu0 0.0
    %v1400 = vand.u32 %v1311, 4294901760
    %v1401 = vsub.f32 %v1311, %v1400
    %1402 = vmatpush.msra.mxu0 %v1401
    %v1403 = vand.u32 %v274, 4294901760
    %v1404 = vsub.f32 %v274, %v1403
    %1405 = vmatpush.msra.mxu0 %v1404
    %v1406 = vand.u32 %v273, 4294901760
    %v1407 = vsub.f32 %v273, %v1406
    %1408 = vmatpush.msra.mxu0 %v1407
    %v1409 = vand.u32 %v272, 4294901760
    %v1410 = vsub.f32 %v272, %v1409
    %1411 = vmatpush.msra.mxu0 %v1410
    %v1412 = vand.u32 %v271, 4294901760
    %v1413 = vsub.f32 %v271, %v1412
    %1414 = vmatpush.msra.mxu0 %v1413
    %v1415 = vand.u32 %v1308, 4294901760
    %v1416 = vsub.f32 %v1308, %v1415
    %1417 = vmatmul.f32.gmra.mxu0 %v1416
    %v1418 = vpop.f32.mrf.mxu0
    %v1419 = vadd.f32 %v1387, %v1418
    %1420 = vdwg.mxu0
    %1421 = vmatpush.msra.mxu0 0.0
    %1422 = vmatpush.msra.mxu0 0.0
    %1423 = vmatpush.msra.mxu0 0.0
    %1424 = vmatpush.msra.mxu0 0.0
    %1425 = vmatpush.msra.mxu0 0.0
    %1426 = vmatpush.msra.mxu0 0.0
    %1427 = vmatpush.msra.mxu0 0.0
    %1428 = vmatpush.msra.mxu0 0.0
    %1429 = vmatpush.msra.mxu0 0.0
    %1430 = vmatpush.msra.mxu0 0.0
    %1431 = vmatpush.msra.mxu0 0.0
    %v1432 = vand.u32 %v1311, 4294901760
    %1433 = vmatpush.msra.mxu0 %v1432
    %v1434 = vand.u32 %v274, 4294901760
    %1435 = vmatpush.msra.mxu0 %v1434
    %v1436 = vand.u32 %v273, 4294901760
    %1437 = vmatpush.msra.mxu0 %v1436
    %v1438 = vand.u32 %v272, 4294901760
    %1439 = vmatpush.msra.mxu0 %v1438
    %v1440 = vand.u32 %v271, 4294901760
    %1441 = vmatpush.msra.mxu0 %v1440
    %v1442 = vand.u32 %v1308, 4294901760
    %v1443 = vsub.f32 %v1308, %v1442
    %v1444 = vand.u32 %v1443, 4294901760
    %1445 = vmatmul.f32.gmra.mxu0 %v1444
    %v1446 = vpop.f32.mrf.mxu0
    %v1447 = vadd.f32 %v1419, %v1446
    %1448 = vdwg.mxu0
    %1449 = vmatpush.msra.mxu0 0.0
    %1450 = vmatpush.msra.mxu0 0.0
    %1451 = vmatpush.msra.mxu0 0.0
    %1452 = vmatpush.msra.mxu0 0.0
    %1453 = vmatpush.msra.mxu0 0.0
    %1454 = vmatpush.msra.mxu0 0.0
    %1455 = vmatpush.msra.mxu0 0.0
    %1456 = vmatpush.msra.mxu0 0.0
    %1457 = vmatpush.msra.mxu0 0.0
    %1458 = vmatpush.msra.mxu0 0.0
    %1459 = vmatpush.msra.mxu0 0.0
    %v1460 = vand.u32 %v1311, 4294901760
    %v1461 = vsub.f32 %v1311, %v1460
    %v1462 = vand.u32 %v1461, 4294901760
    %1463 = vmatpush.msra.mxu0 %v1462
    %v1464 = vand.u32 %v274, 4294901760
    %v1465 = vsub.f32 %v274, %v1464
    %v1466 = vand.u32 %v1465, 4294901760
    %1467 = vmatpush.msra.mxu0 %v1466
    %v1468 = vand.u32 %v273, 4294901760
    %v1469 = vsub.f32 %v273, %v1468
    %v1470 = vand.u32 %v1469, 4294901760
    %1471 = vmatpush.msra.mxu0 %v1470
    %v1472 = vand.u32 %v272, 4294901760
    %v1473 = vsub.f32 %v272, %v1472
    %v1474 = vand.u32 %v1473, 4294901760
    %1475 = vmatpush.msra.mxu0 %v1474
    %v1476 = vand.u32 %v271, 4294901760
    %v1477 = vsub.f32 %v271, %v1476
    %v1478 = vand.u32 %v1477, 4294901760
    %1479 = vmatpush.msra.mxu0 %v1478
    %v1480 = vand.u32 %v1308, 4294901760
    %1481 = vmatmul.f32.gmra.mxu0 %v1480
    %v1482 = vpop.f32.mrf.mxu0
    %v1483 = vadd.f32 %v1447, %v1482
    %1484 = vdwg.mxu0
    %1485 = vmatpush.msra.mxu0 0.0
    %1486 = vmatpush.msra.mxu0 0.0
    %1487 = vmatpush.msra.mxu0 0.0
    %1488 = vmatpush.msra.mxu0 0.0
    %1489 = vmatpush.msra.mxu0 0.0
    %1490 = vmatpush.msra.mxu0 0.0
    %1491 = vmatpush.msra.mxu0 0.0
    %1492 = vmatpush.msra.mxu0 0.0
    %1493 = vmatpush.msra.mxu0 0.0
    %1494 = vmatpush.msra.mxu0 0.0
    %1495 = vmatpush.msra.mxu0 0.0
    %v1496 = vand.u32 %v1311, 4294901760
    %1497 = vmatpush.msra.mxu0 %v1496
    %v1498 = vand.u32 %v274, 4294901760
    %1499 = vmatpush.msra.mxu0 %v1498
    %v1500 = vand.u32 %v273, 4294901760
    %1501 = vmatpush.msra.mxu0 %v1500
    %v1502 = vand.u32 %v272, 4294901760
    %1503 = vmatpush.msra.mxu0 %v1502
    %v1504 = vand.u32 %v271, 4294901760
    %1505 = vmatpush.msra.mxu0 %v1504
    %v1506 = vand.u32 %v1308, 4294901760
    %1507 = vmatmul.f32.gmra.mxu0 %v1506
    %v1508 = vpop.f32.mrf.mxu0
    %v1509 = vadd.f32 %v1483, %v1508
    %1510 = vdwg.mxu0
    %v1512 = vsel %vm39, %v142, 0
    %v1515 = vsel %vm289, %v280, 0
    %1517 = vmatpush.msra.mxu0 0.0
    %1518 = vmatpush.msra.mxu0 0.0
    %1519 = vmatpush.msra.mxu0 0.0
    %1520 = vmatpush.msra.mxu0 0.0
    %1521 = vmatpush.msra.mxu0 0.0
    %1522 = vmatpush.msra.mxu0 0.0
    %1523 = vmatpush.msra.mxu0 0.0
    %1524 = vmatpush.msra.mxu0 0.0
    %1525 = vmatpush.msra.mxu0 0.0
    %1526 = vmatpush.msra.mxu0 0.0
    %1527 = vmatpush.msra.mxu0 0.0
    %v1528 = vand.u32 %v1515, 4294901760
    %1529 = vmatpush.msra.mxu0 %v1528
    %v1530 = vand.u32 %v279, 4294901760
    %1531 = vmatpush.msra.mxu0 %v1530
    %v1532 = vand.u32 %v278, 4294901760
    %1533 = vmatpush.msra.mxu0 %v1532
    %v1534 = vand.u32 %v277, 4294901760
    %1535 = vmatpush.msra.mxu0 %v1534
    %v1536 = vand.u32 %v276, 4294901760
    %1537 = vmatpush.msra.mxu0 %v1536
    %v1538 = vand.u32 %v1512, 4294901760
    %v1539 = vsub.f32 %v1512, %v1538
    %v1540 = vand.u32 %v1539, 4294901760
    %v1541 = vsub.f32 %v1539, %v1540
    %v1542 = vand.u32 %v1541, 4294901760
    %1543 = vmatmul.f32.gmra.mxu0 %v1542
    %v1544 = vpop.f32.mrf.mxu0
    %v1545 = vadd.f32 0.0, %v1544
    %1546 = vdwg.mxu0
    %1547 = vmatpush.msra.mxu0 0.0
    %1548 = vmatpush.msra.mxu0 0.0
    %1549 = vmatpush.msra.mxu0 0.0
    %1550 = vmatpush.msra.mxu0 0.0
    %1551 = vmatpush.msra.mxu0 0.0
    %1552 = vmatpush.msra.mxu0 0.0
    %1553 = vmatpush.msra.mxu0 0.0
    %1554 = vmatpush.msra.mxu0 0.0
    %1555 = vmatpush.msra.mxu0 0.0
    %1556 = vmatpush.msra.mxu0 0.0
    %1557 = vmatpush.msra.mxu0 0.0
    %v1558 = vand.u32 %v1515, 4294901760
    %v1559 = vsub.f32 %v1515, %v1558
    %v1560 = vand.u32 %v1559, 4294901760
    %v1561 = vsub.f32 %v1559, %v1560
    %v1562 = vand.u32 %v1561, 4294901760
    %1563 = vmatpush.msra.mxu0 %v1562
    %v1564 = vand.u32 %v279, 4294901760
    %v1565 = vsub.f32 %v279, %v1564
    %v1566 = vand.u32 %v1565, 4294901760
    %v1567 = vsub.f32 %v1565, %v1566
    %v1568 = vand.u32 %v1567, 4294901760
    %1569 = vmatpush.msra.mxu0 %v1568
    %v1570 = vand.u32 %v278, 4294901760
    %v1571 = vsub.f32 %v278, %v1570
    %v1572 = vand.u32 %v1571, 4294901760
    %v1573 = vsub.f32 %v1571, %v1572
    %v1574 = vand.u32 %v1573, 4294901760
    %1575 = vmatpush.msra.mxu0 %v1574
    %v1576 = vand.u32 %v277, 4294901760
    %v1577 = vsub.f32 %v277, %v1576
    %v1578 = vand.u32 %v1577, 4294901760
    %v1579 = vsub.f32 %v1577, %v1578
    %v1580 = vand.u32 %v1579, 4294901760
    %1581 = vmatpush.msra.mxu0 %v1580
    %v1582 = vand.u32 %v276, 4294901760
    %v1583 = vsub.f32 %v276, %v1582
    %v1584 = vand.u32 %v1583, 4294901760
    %v1585 = vsub.f32 %v1583, %v1584
    %v1586 = vand.u32 %v1585, 4294901760
    %1587 = vmatpush.msra.mxu0 %v1586
    %v1588 = vand.u32 %v1512, 4294901760
    %1589 = vmatmul.f32.gmra.mxu0 %v1588
    %v1590 = vpop.f32.mrf.mxu0
    %v1591 = vadd.f32 %v1545, %v1590
    %1592 = vdwg.mxu0
    %1593 = vmatpush.msra.mxu0 0.0
    %1594 = vmatpush.msra.mxu0 0.0
    %1595 = vmatpush.msra.mxu0 0.0
    %1596 = vmatpush.msra.mxu0 0.0
    %1597 = vmatpush.msra.mxu0 0.0
    %1598 = vmatpush.msra.mxu0 0.0
    %1599 = vmatpush.msra.mxu0 0.0
    %1600 = vmatpush.msra.mxu0 0.0
    %1601 = vmatpush.msra.mxu0 0.0
    %1602 = vmatpush.msra.mxu0 0.0
    %1603 = vmatpush.msra.mxu0 0.0
    %v1604 = vand.u32 %v1515, 4294901760
    %v1605 = vsub.f32 %v1515, %v1604
    %1606 = vmatpush.msra.mxu0 %v1605
    %v1607 = vand.u32 %v279, 4294901760
    %v1608 = vsub.f32 %v279, %v1607
    %1609 = vmatpush.msra.mxu0 %v1608
    %v1610 = vand.u32 %v278, 4294901760
    %v1611 = vsub.f32 %v278, %v1610
    %1612 = vmatpush.msra.mxu0 %v1611
    %v1613 = vand.u32 %v277, 4294901760
    %v1614 = vsub.f32 %v277, %v1613
    %1615 = vmatpush.msra.mxu0 %v1614
    %v1616 = vand.u32 %v276, 4294901760
    %v1617 = vsub.f32 %v276, %v1616
    %1618 = vmatpush.msra.mxu0 %v1617
    %v1619 = vand.u32 %v1512, 4294901760
    %v1620 = vsub.f32 %v1512, %v1619
    %1621 = vmatmul.f32.gmra.mxu0 %v1620
    %v1622 = vpop.f32.mrf.mxu0
    %v1623 = vadd.f32 %v1591, %v1622
    %1624 = vdwg.mxu0
    %1625 = vmatpush.msra.mxu0 0.0
    %1626 = vmatpush.msra.mxu0 0.0
    %1627 = vmatpush.msra.mxu0 0.0
    %1628 = vmatpush.msra.mxu0 0.0
    %1629 = vmatpush.msra.mxu0 0.0
    %1630 = vmatpush.msra.mxu0 0.0
    %1631 = vmatpush.msra.mxu0 0.0
    %1632 = vmatpush.msra.mxu0 0.0
    %1633 = vmatpush.msra.mxu0 0.0
    %1634 = vmatpush.msra.mxu0 0.0
    %1635 = vmatpush.msra.mxu0 0.0
    %v1636 = vand.u32 %v1515, 4294901760
    %1637 = vmatpush.msra.mxu0 %v1636
    %v1638 = vand.u32 %v279, 4294901760
    %1639 = vmatpush.msra.mxu0 %v1638
    %v1640 = vand.u32 %v278, 4294901760
    %1641 = vmatpush.msra.mxu0 %v1640
    %v1642 = vand.u32 %v277, 4294901760
    %1643 = vmatpush.msra.mxu0 %v1642
    %v1644 = vand.u32 %v276, 4294901760
    %1645 = vmatpush.msra.mxu0 %v1644
    %v1646 = vand.u32 %v1512, 4294901760
    %v1647 = vsub.f32 %v1512, %v1646
    %v1648 = vand.u32 %v1647, 4294901760
    %1649 = vmatmul.f32.gmra.mxu0 %v1648
    %v1650 = vpop.f32.mrf.mxu0
    %v1651 = vadd.f32 %v1623, %v1650
    %1652 = vdwg.mxu0
    %1653 = vmatpush.msra.mxu0 0.0
    %1654 = vmatpush.msra.mxu0 0.0
    %1655 = vmatpush.msra.mxu0 0.0
    %1656 = vmatpush.msra.mxu0 0.0
    %1657 = vmatpush.msra.mxu0 0.0
    %1658 = vmatpush.msra.mxu0 0.0
    %1659 = vmatpush.msra.mxu0 0.0
    %1660 = vmatpush.msra.mxu0 0.0
    %1661 = vmatpush.msra.mxu0 0.0
    %1662 = vmatpush.msra.mxu0 0.0
    %1663 = vmatpush.msra.mxu0 0.0
    %v1664 = vand.u32 %v1515, 4294901760
    %v1665 = vsub.f32 %v1515, %v1664
    %v1666 = vand.u32 %v1665, 4294901760
    %1667 = vmatpush.msra.mxu0 %v1666
    %v1668 = vand.u32 %v279, 4294901760
    %v1669 = vsub.f32 %v279, %v1668
    %v1670 = vand.u32 %v1669, 4294901760
    %1671 = vmatpush.msra.mxu0 %v1670
    %v1672 = vand.u32 %v278, 4294901760
    %v1673 = vsub.f32 %v278, %v1672
    %v1674 = vand.u32 %v1673, 4294901760
    %1675 = vmatpush.msra.mxu0 %v1674
    %v1676 = vand.u32 %v277, 4294901760
    %v1677 = vsub.f32 %v277, %v1676
    %v1678 = vand.u32 %v1677, 4294901760
    %1679 = vmatpush.msra.mxu0 %v1678
    %v1680 = vand.u32 %v276, 4294901760
    %v1681 = vsub.f32 %v276, %v1680
    %v1682 = vand.u32 %v1681, 4294901760
    %1683 = vmatpush.msra.mxu0 %v1682
    %v1684 = vand.u32 %v1512, 4294901760
    %1685 = vmatmul.f32.gmra.mxu0 %v1684
    %v1686 = vpop.f32.mrf.mxu0
    %v1687 = vadd.f32 %v1651, %v1686
    %1688 = vdwg.mxu0
    %1689 = vmatpush.msra.mxu0 0.0
    %1690 = vmatpush.msra.mxu0 0.0
    %1691 = vmatpush.msra.mxu0 0.0
    %1692 = vmatpush.msra.mxu0 0.0
    %1693 = vmatpush.msra.mxu0 0.0
    %1694 = vmatpush.msra.mxu0 0.0
    %1695 = vmatpush.msra.mxu0 0.0
    %1696 = vmatpush.msra.mxu0 0.0
    %1697 = vmatpush.msra.mxu0 0.0
    %1698 = vmatpush.msra.mxu0 0.0
    %1699 = vmatpush.msra.mxu0 0.0
    %v1700 = vand.u32 %v1515, 4294901760
    %1701 = vmatpush.msra.mxu0 %v1700
    %v1702 = vand.u32 %v279, 4294901760
    %1703 = vmatpush.msra.mxu0 %v1702
    %v1704 = vand.u32 %v278, 4294901760
    %1705 = vmatpush.msra.mxu0 %v1704
    %v1706 = vand.u32 %v277, 4294901760
    %1707 = vmatpush.msra.mxu0 %v1706
    %v1708 = vand.u32 %v276, 4294901760
    %1709 = vmatpush.msra.mxu0 %v1708
    %v1710 = vand.u32 %v1512, 4294901760
    %1711 = vmatmul.f32.gmra.mxu0 %v1710
    %v1712 = vpop.f32.mrf.mxu0
    %v1713 = vadd.f32 %v1687, %v1712
    %1714 = vdwg.mxu0
    %v1716 = vsel %vm39, %v143, 0
    %v1719 = vsel %vm289, %v285, 0
    %1721 = vmatpush.msra.mxu0 0.0
    %1722 = vmatpush.msra.mxu0 0.0
    %1723 = vmatpush.msra.mxu0 0.0
    %1724 = vmatpush.msra.mxu0 0.0
    %1725 = vmatpush.msra.mxu0 0.0
    %1726 = vmatpush.msra.mxu0 0.0
    %1727 = vmatpush.msra.mxu0 0.0
    %1728 = vmatpush.msra.mxu0 0.0
    %1729 = vmatpush.msra.mxu0 0.0
    %1730 = vmatpush.msra.mxu0 0.0
    %1731 = vmatpush.msra.mxu0 0.0
    %v1732 = vand.u32 %v1719, 4294901760
    %1733 = vmatpush.msra.mxu0 %v1732
    %v1734 = vand.u32 %v284, 4294901760
    %1735 = vmatpush.msra.mxu0 %v1734
    %v1736 = vand.u32 %v283, 4294901760
    %1737 = vmatpush.msra.mxu0 %v1736
    %v1738 = vand.u32 %v282, 4294901760
    %1739 = vmatpush.msra.mxu0 %v1738
    %v1740 = vand.u32 %v281, 4294901760
    %1741 = vmatpush.msra.mxu0 %v1740
    %v1742 = vand.u32 %v1716, 4294901760
    %v1743 = vsub.f32 %v1716, %v1742
    %v1744 = vand.u32 %v1743, 4294901760
    %v1745 = vsub.f32 %v1743, %v1744
    %v1746 = vand.u32 %v1745, 4294901760
    %1747 = vmatmul.f32.gmra.mxu0 %v1746
    %v1748 = vpop.f32.mrf.mxu0
    %v1749 = vadd.f32 0.0, %v1748
    %1750 = vdwg.mxu0
    %1751 = vmatpush.msra.mxu0 0.0
    %1752 = vmatpush.msra.mxu0 0.0
    %1753 = vmatpush.msra.mxu0 0.0
    %1754 = vmatpush.msra.mxu0 0.0
    %1755 = vmatpush.msra.mxu0 0.0
    %1756 = vmatpush.msra.mxu0 0.0
    %1757 = vmatpush.msra.mxu0 0.0
    %1758 = vmatpush.msra.mxu0 0.0
    %1759 = vmatpush.msra.mxu0 0.0
    %1760 = vmatpush.msra.mxu0 0.0
    %1761 = vmatpush.msra.mxu0 0.0
    %v1762 = vand.u32 %v1719, 4294901760
    %v1763 = vsub.f32 %v1719, %v1762
    %v1764 = vand.u32 %v1763, 4294901760
    %v1765 = vsub.f32 %v1763, %v1764
    %v1766 = vand.u32 %v1765, 4294901760
    %1767 = vmatpush.msra.mxu0 %v1766
    %v1768 = vand.u32 %v284, 4294901760
    %v1769 = vsub.f32 %v284, %v1768
    %v1770 = vand.u32 %v1769, 4294901760
    %v1771 = vsub.f32 %v1769, %v1770
    %v1772 = vand.u32 %v1771, 4294901760
    %1773 = vmatpush.msra.mxu0 %v1772
    %v1774 = vand.u32 %v283, 4294901760
    %v1775 = vsub.f32 %v283, %v1774
    %v1776 = vand.u32 %v1775, 4294901760
    %v1777 = vsub.f32 %v1775, %v1776
    %v1778 = vand.u32 %v1777, 4294901760
    %1779 = vmatpush.msra.mxu0 %v1778
    %v1780 = vand.u32 %v282, 4294901760
    %v1781 = vsub.f32 %v282, %v1780
    %v1782 = vand.u32 %v1781, 4294901760
    %v1783 = vsub.f32 %v1781, %v1782
    %v1784 = vand.u32 %v1783, 4294901760
    %1785 = vmatpush.msra.mxu0 %v1784
    %v1786 = vand.u32 %v281, 4294901760
    %v1787 = vsub.f32 %v281, %v1786
    %v1788 = vand.u32 %v1787, 4294901760
    %v1789 = vsub.f32 %v1787, %v1788
    %v1790 = vand.u32 %v1789, 4294901760
    %1791 = vmatpush.msra.mxu0 %v1790
    %v1792 = vand.u32 %v1716, 4294901760
    %1793 = vmatmul.f32.gmra.mxu0 %v1792
    %v1794 = vpop.f32.mrf.mxu0
    %v1795 = vadd.f32 %v1749, %v1794
    %1796 = vdwg.mxu0
    %1797 = vmatpush.msra.mxu0 0.0
    %1798 = vmatpush.msra.mxu0 0.0
    %1799 = vmatpush.msra.mxu0 0.0
    %1800 = vmatpush.msra.mxu0 0.0
    %1801 = vmatpush.msra.mxu0 0.0
    %1802 = vmatpush.msra.mxu0 0.0
    %1803 = vmatpush.msra.mxu0 0.0
    %1804 = vmatpush.msra.mxu0 0.0
    %1805 = vmatpush.msra.mxu0 0.0
    %1806 = vmatpush.msra.mxu0 0.0
    %1807 = vmatpush.msra.mxu0 0.0
    %v1808 = vand.u32 %v1719, 4294901760
    %v1809 = vsub.f32 %v1719, %v1808
    %1810 = vmatpush.msra.mxu0 %v1809
    %v1811 = vand.u32 %v284, 4294901760
    %v1812 = vsub.f32 %v284, %v1811
    %1813 = vmatpush.msra.mxu0 %v1812
    %v1814 = vand.u32 %v283, 4294901760
    %v1815 = vsub.f32 %v283, %v1814
    %1816 = vmatpush.msra.mxu0 %v1815
    %v1817 = vand.u32 %v282, 4294901760
    %v1818 = vsub.f32 %v282, %v1817
    %1819 = vmatpush.msra.mxu0 %v1818
    %v1820 = vand.u32 %v281, 4294901760
    %v1821 = vsub.f32 %v281, %v1820
    %1822 = vmatpush.msra.mxu0 %v1821
    %v1823 = vand.u32 %v1716, 4294901760
    %v1824 = vsub.f32 %v1716, %v1823
    %1825 = vmatmul.f32.gmra.mxu0 %v1824
    %v1826 = vpop.f32.mrf.mxu0
    %v1827 = vadd.f32 %v1795, %v1826
    %1828 = vdwg.mxu0
    %1829 = vmatpush.msra.mxu0 0.0
    %1830 = vmatpush.msra.mxu0 0.0
    %1831 = vmatpush.msra.mxu0 0.0
    %1832 = vmatpush.msra.mxu0 0.0
    %1833 = vmatpush.msra.mxu0 0.0
    %1834 = vmatpush.msra.mxu0 0.0
    %1835 = vmatpush.msra.mxu0 0.0
    %1836 = vmatpush.msra.mxu0 0.0
    %1837 = vmatpush.msra.mxu0 0.0
    %1838 = vmatpush.msra.mxu0 0.0
    %1839 = vmatpush.msra.mxu0 0.0
    %v1840 = vand.u32 %v1719, 4294901760
    %1841 = vmatpush.msra.mxu0 %v1840
    %v1842 = vand.u32 %v284, 4294901760
    %1843 = vmatpush.msra.mxu0 %v1842
    %v1844 = vand.u32 %v283, 4294901760
    %1845 = vmatpush.msra.mxu0 %v1844
    %v1846 = vand.u32 %v282, 4294901760
    %1847 = vmatpush.msra.mxu0 %v1846
    %v1848 = vand.u32 %v281, 4294901760
    %1849 = vmatpush.msra.mxu0 %v1848
    %v1850 = vand.u32 %v1716, 4294901760
    %v1851 = vsub.f32 %v1716, %v1850
    %v1852 = vand.u32 %v1851, 4294901760
    %1853 = vmatmul.f32.gmra.mxu0 %v1852
    %v1854 = vpop.f32.mrf.mxu0
    %v1855 = vadd.f32 %v1827, %v1854
    %1856 = vdwg.mxu0
    %1857 = vmatpush.msra.mxu0 0.0
    %1858 = vmatpush.msra.mxu0 0.0
    %1859 = vmatpush.msra.mxu0 0.0
    %1860 = vmatpush.msra.mxu0 0.0
    %1861 = vmatpush.msra.mxu0 0.0
    %1862 = vmatpush.msra.mxu0 0.0
    %1863 = vmatpush.msra.mxu0 0.0
    %1864 = vmatpush.msra.mxu0 0.0
    %1865 = vmatpush.msra.mxu0 0.0
    %1866 = vmatpush.msra.mxu0 0.0
    %1867 = vmatpush.msra.mxu0 0.0
    %v1868 = vand.u32 %v1719, 4294901760
    %v1869 = vsub.f32 %v1719, %v1868
    %v1870 = vand.u32 %v1869, 4294901760
    %1871 = vmatpush.msra.mxu0 %v1870
    %v1872 = vand.u32 %v284, 4294901760
    %v1873 = vsub.f32 %v284, %v1872
    %v1874 = vand.u32 %v1873, 4294901760
    %1875 = vmatpush.msra.mxu0 %v1874
    %v1876 = vand.u32 %v283, 4294901760
    %v1877 = vsub.f32 %v283, %v1876
    %v1878 = vand.u32 %v1877, 4294901760
    %1879 = vmatpush.msra.mxu0 %v1878
    %v1880 = vand.u32 %v282, 4294901760
    %v1881 = vsub.f32 %v282, %v1880
    %v1882 = vand.u32 %v1881, 4294901760
    %1883 = vmatpush.msra.mxu0 %v1882
    %v1884 = vand.u32 %v281, 4294901760
    %v1885 = vsub.f32 %v281, %v1884
    %v1886 = vand.u32 %v1885, 4294901760
    %1887 = vmatpush.msra.mxu0 %v1886
    %v1888 = vand.u32 %v1716, 4294901760
    %1889 = vmatmul.f32.gmra.mxu0 %v1888
    %v1890 = vpop.f32.mrf.mxu0
    %v1891 = vadd.f32 %v1855, %v1890
    %1892 = vdwg.mxu0
    %1893 = vmatpush.msra.mxu0 0.0
    %1894 = vmatpush.msra.mxu0 0.0
    %1895 = vmatpush.msra.mxu0 0.0
    %1896 = vmatpush.msra.mxu0 0.0
    %1897 = vmatpush.msra.mxu0 0.0
    %1898 = vmatpush.msra.mxu0 0.0
    %1899 = vmatpush.msra.mxu0 0.0
    %1900 = vmatpush.msra.mxu0 0.0
    %1901 = vmatpush.msra.mxu0 0.0
    %1902 = vmatpush.msra.mxu0 0.0
    %1903 = vmatpush.msra.mxu0 0.0
    %v1904 = vand.u32 %v1719, 4294901760
    %1905 = vmatpush.msra.mxu0 %v1904
    %v1906 = vand.u32 %v284, 4294901760
    %1907 = vmatpush.msra.mxu0 %v1906
    %v1908 = vand.u32 %v283, 4294901760
    %1909 = vmatpush.msra.mxu0 %v1908
    %v1910 = vand.u32 %v282, 4294901760
    %1911 = vmatpush.msra.mxu0 %v1910
    %v1912 = vand.u32 %v281, 4294901760
    %1913 = vmatpush.msra.mxu0 %v1912
    %v1914 = vand.u32 %v1716, 4294901760
    %1915 = vmatmul.f32.gmra.mxu0 %v1914
    %v1916 = vpop.f32.mrf.mxu0
    %v1917 = vadd.f32 %v1891, %v1916
    %1918 = vdwg.mxu0
    %v1927 = vrot.slane %v693, 7
    %vm1928 = vcmask 1041409
    %v1929 = vsel %vm1928, %v1927, %v489
    %v1930 = vrot.slane %v897, 6
    %vm1931 = vcmask 1042434
    %v1932 = vsel %vm1931, %v1930, %v1929
    %v1933 = vrot.slane %v1101, 5
    %vm1934 = vcmask 1043459
    %v1935 = vsel %vm1934, %v1933, %v1932
    %v1936 = vrot.slane %v1305, 4
    %vm1937 = vcmask 1044484
    %v1938 = vsel %vm1937, %v1936, %v1935
    %v1939 = vrot.slane %v1509, 3
    %vm1940 = vcmask 1045509
    %v1941 = vsel %vm1940, %v1939, %v1938
    %v1942 = vrot.slane %v1713, 2
    %vm1943 = vcmask 1046534
    %v1944 = vsel %vm1943, %v1942, %v1941
    %v1945 = vrot.slane %v1917, 1
    %vm1946 = vcmask 1047559
    %v1947 = vsel %vm1946, %v1945, %v1944
    %1949 = vst [vmem:[#allocation2] sm:$0xff] %v1947
    %v1950 = vsel %vm1931, %v1927, %v489
    %v1951 = vsel %vm1934, %v1930, %v1950
    %v1952 = vsel %vm1937, %v1933, %v1951
    %v1953 = vsel %vm1940, %v1936, %v1952
    %v1954 = vsel %vm1943, %v1939, %v1953
    %v1955 = vsel %vm1946, %v1942, %v1954
    %s1958 = scalar_lea.vmem [#allocation2], 8
    %1959 = vst [vmem:[%s1958 - $0x1] sm:$0xfe] %v1955
    %1960 = vst [vmem:[%s1958 + $0x7] sm:$0x1] %v1945
    %v1961 = vsel %vm1934, %v1927, %v489
    %v1962 = vsel %vm1937, %v1930, %v1961
    %v1963 = vsel %vm1940, %v1933, %v1962
    %v1964 = vsel %vm1943, %v1936, %v1963
    %v1965 = vsel %vm1946, %v1939, %v1964
    %v1966 = vsel %vm1928, %v1945, %v1942
    %s1969 = scalar_lea.vmem [#allocation2], 16
    %1970 = vst [vmem:[%s1969 - $0x2] sm:$0xfc] %v1965
    %1971 = vst [vmem:[%s1969 + $0x6] sm:$0x3] %v1966
    %v1972 = vsel %vm1937, %v1927, %v489
    %v1973 = vsel %vm1940, %v1930, %v1972
    %v1974 = vsel %vm1943, %v1933, %v1973
    %v1975 = vsel %vm1946, %v1936, %v1974
    %v1976 = vsel %vm1928, %v1942, %v1939
    %v1977 = vsel %vm1931, %v1945, %v1976
    %s1980 = scalar_lea.vmem [#allocation2], 24
    %1981 = vst [vmem:[%s1980 - $0x3] sm:$0xf8] %v1975
    %1982 = vst [vmem:[%s1980 + $0x5] sm:$0x7] %v1977
    %v1983 = vsel %vm1940, %v1927, %v489
    %v1984 = vsel %vm1943, %v1930, %v1983
    %v1985 = vsel %vm1946, %v1933, %v1984
    %v1986 = vsel %vm1928, %v1939, %v1936
    %v1987 = vsel %vm1931, %v1942, %v1986
    %v1988 = vsel %vm1934, %v1945, %v1987
    %s1991 = scalar_lea.vmem [#allocation2], 32
    %1992 = vst [vmem:[%s1991 - $0x4] sm:$0xf0] %v1985
    %1993 = vst [vmem:[%s1991 + $0x4] sm:$0xf] %v1988
    %v1994 = vsel %vm1943, %v1927, %v489
    %v1995 = vsel %vm1946, %v1930, %v1994
    %v1996 = vsel %vm1928, %v1936, %v1933
    %v1997 = vsel %vm1931, %v1939, %v1996
    %v1998 = vsel %vm1934, %v1942, %v1997
    %v1999 = vsel %vm1937, %v1945, %v1998
    %s2002 = scalar_lea.vmem [#allocation2], 40
    %2003 = vst [vmem:[%s2002 - $0x5] sm:$0xe0] %v1995
    %2004 = vst [vmem:[%s2002 + $0x3] sm:$0x1f] %v1999
    %v2005 = vsel %vm1946, %v1927, %v489
    %v2006 = vsel %vm1928, %v1933, %v1930
    %v2007 = vsel %vm1931, %v1936, %v2006
    %v2008 = vsel %vm1934, %v1939, %v2007
    %v2009 = vsel %vm1937, %v1942, %v2008
    %v2010 = vsel %vm1940, %v1945, %v2009
    %s2013 = scalar_lea.vmem [#allocation2], 48
    %2014 = vst [vmem:[%s2013 - $0x6] sm:$0xc0] %v2005
    %2015 = vst [vmem:[%s2013 + $0x2] sm:$0x3f] %v2010
    %v2016 = vsel %vm1928, %v1930, %v1927
    %v2017 = vsel %vm1931, %v1933, %v2016
    %v2018 = vsel %vm1934, %v1936, %v2017
    %v2019 = vsel %vm1937, %v1939, %v2018
    %v2020 = vsel %vm1940, %v1942, %v2019
    %v2021 = vsel %vm1943, %v1945, %v2020
    %s2024 = scalar_lea.vmem [#allocation2], 56
    %2025 = vst [vmem:[%s2024 - $0x7] sm:$0x80] %v489
    %2026 = vst [vmem:[%s2024 + $0x1] sm:$0x7f] %v2021
    %v2027 = vlaneseq
    %v2028 = vand.u32 %v2027, 127
    %v2029 = vcvt.s32.f32 %v144
    %2030 = vrot.lane.b32.xlu0 %v2029, 2
    %v2031 = vpop.permute.xlu0 %2030
    %vm2032 = vcmp.ge.s32.totalorder %v2028, 2
    %vm2033 = vcmp.ne.s32.totalorder %v144, 36
    %vm2034 = vmand %vm2032, %vm2033
    %vm2035 = vcmp.ne.f32.partialorder %v2029, %v2031
    %vm2036 = vmand %vm2034, %vm2035
    %v2037 = vsel %vm2036, 0.0, -1e+30
    %v2038 = vld [vmem:[%s2] sm:$0xff]
    %v2039 = vmul.u32 %v2038, 2
    %v2040 = vadd.s32 %v2039, 1
    %2041 = vset.pattern.permute.xlu0 0
    %2042 = vperm.xlu0 %2041, %v2039
    %v2043 = vpop.permute.xlu0 %2042
    %vm2044 = vcmp.eq.s32.totalorder %v2028, %v2043
    %v2045 = vsub.s32 %v2040, 2
    %2046 = vset.pattern.permute.xlu0 0
    %2047 = vperm.xlu0 %2046, %v2045
    %v2048 = vpop.permute.xlu0 %2047
    %vm2049 = vcmp.eq.s32.totalorder %v2028, %v2048
    %vm2050 = vmor %vm2044, %vm2049
    %v2051 = vsel %vm2050, 0.0, -1e+30
    %v2052 = vld [vmem:[#allocation2] sm:$0xff]
    %vm2053 = vcmp.lt.s32.totalorder %v2028, 2
    %v2054 = vsel %vm2053, 0.0, -1e+30
    %v2055 = vadd.f32 %v2052, %v2054
    %2056 = vst [vmem:[#allocation3] sm:$0xff] %v2055
    %v2057 = vld [vmem:[#allocation3] sm:$0xff]
    %vm2058 = vcmp.lt.s32.totalorder %v2028, 1
    %2059 = vrot.lane.b32.xlu0 %v2057, 1
    %v2060 = vpop.permute.xlu0 %2059
    %v2061 = vsel %vm2058, -1e+30, %v2060
    %2062 = vrot.lane.b32.xlu0 %v2057, 2
    %v2063 = vpop.permute.xlu0 %2062
    %v2064 = vsel %vm2053, -1e+30, %v2063
    %v2065 = vadd.f32 %v2064, %v2037
    %v2066 = vmax.f32 %v2057, %v2061
    %v2067 = vmax.f32 %v2066, %v2065
    %v2068 = vsub.f32 %v2057, %v2067
    %v2069 = vmul.f32 %v2068, 1.442695
    %v2070 = vpow.pop %v2069
    %v2071 = vsub.f32 %v2061, %v2067
    %v2072 = vmul.f32 %v2071, 1.442695
    %v2073 = vpow.pop %v2072
    %v2074 = vadd.f32 %v2070, %v2073
    %v2075 = vsub.f32 %v2065, %v2067
    %v2076 = vmul.f32 %v2075, 1.442695
    %v2077 = vpow.pop %v2076
    %v2078 = vadd.f32 %v2074, %v2077
    %v2079 = vld [vmem:[%s1958] sm:$0xff]
    %v2080 = vadd.f32 %v2079, %v2067
    %v2081 = vlog2.pop %v2078
    %v2082 = vmul.f32 %v2081, 0.6931472
    %v2083 = vadd.f32 %v2080, %v2082
    %2084 = vst [vmem:[#allocation3] sm:$0xff] %v2083
    %v2085 = vld [vmem:[#allocation3] sm:$0xff]
    %2086 = vrot.lane.b32.xlu0 %v2085, 1
    %v2087 = vpop.permute.xlu0 %2086
    %v2088 = vsel %vm2058, -1e+30, %v2087
    %2089 = vrot.lane.b32.xlu0 %v2085, 2
    %v2090 = vpop.permute.xlu0 %2089
    %v2091 = vsel %vm2053, -1e+30, %v2090
    %v2092 = vadd.f32 %v2091, %v2037
    %v2093 = vmax.f32 %v2085, %v2088
    %v2094 = vmax.f32 %v2093, %v2092
    %v2095 = vsub.f32 %v2085, %v2094
    %v2096 = vmul.f32 %v2095, 1.442695
    %v2097 = vpow.pop %v2096
    %v2098 = vsub.f32 %v2088, %v2094
    %v2099 = vmul.f32 %v2098, 1.442695
    %v2100 = vpow.pop %v2099
    %v2101 = vadd.f32 %v2097, %v2100
    %v2102 = vsub.f32 %v2092, %v2094
    %v2103 = vmul.f32 %v2102, 1.442695
    %v2104 = vpow.pop %v2103
    %v2105 = vadd.f32 %v2101, %v2104
    %v2106 = vld [vmem:[%s1969] sm:$0xff]
    %v2107 = vadd.f32 %v2106, %v2094
    %v2108 = vlog2.pop %v2105
    %v2109 = vmul.f32 %v2108, 0.6931472
    %v2110 = vadd.f32 %v2107, %v2109
    %2111 = vst [vmem:[#allocation3] sm:$0xff] %v2110
    %v2112 = vld [vmem:[#allocation3] sm:$0xff]
    %2113 = vrot.lane.b32.xlu0 %v2112, 1
    %v2114 = vpop.permute.xlu0 %2113
    %v2115 = vsel %vm2058, -1e+30, %v2114
    %2116 = vrot.lane.b32.xlu0 %v2112, 2
    %v2117 = vpop.permute.xlu0 %2116
    %v2118 = vsel %vm2053, -1e+30, %v2117
    %v2119 = vadd.f32 %v2118, %v2037
    %v2120 = vmax.f32 %v2112, %v2115
    %v2121 = vmax.f32 %v2120, %v2119
    %v2122 = vsub.f32 %v2112, %v2121
    %v2123 = vmul.f32 %v2122, 1.442695
    %v2124 = vpow.pop %v2123
    %v2125 = vsub.f32 %v2115, %v2121
    %v2126 = vmul.f32 %v2125, 1.442695
    %v2127 = vpow.pop %v2126
    %v2128 = vadd.f32 %v2124, %v2127
    %v2129 = vsub.f32 %v2119, %v2121
    %v2130 = vmul.f32 %v2129, 1.442695
    %v2131 = vpow.pop %v2130
    %v2132 = vadd.f32 %v2128, %v2131
    %v2133 = vld [vmem:[%s1980] sm:$0xff]
    %v2134 = vadd.f32 %v2133, %v2121
    %v2135 = vlog2.pop %v2132
    %v2136 = vmul.f32 %v2135, 0.6931472
    %v2137 = vadd.f32 %v2134, %v2136
    %2138 = vst [vmem:[#allocation3] sm:$0xff] %v2137
    %v2139 = vld [vmem:[#allocation3] sm:$0xff]
    %2140 = vrot.lane.b32.xlu0 %v2139, 1
    %v2141 = vpop.permute.xlu0 %2140
    %v2142 = vsel %vm2058, -1e+30, %v2141
    %2143 = vrot.lane.b32.xlu0 %v2139, 2
    %v2144 = vpop.permute.xlu0 %2143
    %v2145 = vsel %vm2053, -1e+30, %v2144
    %v2146 = vadd.f32 %v2145, %v2037
    %v2147 = vmax.f32 %v2139, %v2142
    %v2148 = vmax.f32 %v2147, %v2146
    %v2149 = vsub.f32 %v2139, %v2148
    %v2150 = vmul.f32 %v2149, 1.442695
    %v2151 = vpow.pop %v2150
    %v2152 = vsub.f32 %v2142, %v2148
    %v2153 = vmul.f32 %v2152, 1.442695
    %v2154 = vpow.pop %v2153
    %v2155 = vadd.f32 %v2151, %v2154
    %v2156 = vsub.f32 %v2146, %v2148
    %v2157 = vmul.f32 %v2156, 1.442695
    %v2158 = vpow.pop %v2157
    %v2159 = vadd.f32 %v2155, %v2158
    %v2160 = vld [vmem:[%s1991] sm:$0xff]
    %v2161 = vadd.f32 %v2160, %v2148
    %v2162 = vlog2.pop %v2159
    %v2163 = vmul.f32 %v2162, 0.6931472
    %v2164 = vadd.f32 %v2161, %v2163
    %2165 = vst [vmem:[#allocation3] sm:$0xff] %v2164
    %v2166 = vld [vmem:[#allocation3] sm:$0xff]
    %2167 = vrot.lane.b32.xlu0 %v2166, 1
    %v2168 = vpop.permute.xlu0 %2167
    %v2169 = vsel %vm2058, -1e+30, %v2168
    %2170 = vrot.lane.b32.xlu0 %v2166, 2
    %v2171 = vpop.permute.xlu0 %2170
    %v2172 = vsel %vm2053, -1e+30, %v2171
    %v2173 = vadd.f32 %v2172, %v2037
    %v2174 = vmax.f32 %v2166, %v2169
    %v2175 = vmax.f32 %v2174, %v2173
    %v2176 = vsub.f32 %v2166, %v2175
    %v2177 = vmul.f32 %v2176, 1.442695
    %v2178 = vpow.pop %v2177
    %v2179 = vsub.f32 %v2169, %v2175
    %v2180 = vmul.f32 %v2179, 1.442695
    %v2181 = vpow.pop %v2180
    %v2182 = vadd.f32 %v2178, %v2181
    %v2183 = vsub.f32 %v2173, %v2175
    %v2184 = vmul.f32 %v2183, 1.442695
    %v2185 = vpow.pop %v2184
    %v2186 = vadd.f32 %v2182, %v2185
    %v2187 = vld [vmem:[%s2002] sm:$0xff]
    %v2188 = vadd.f32 %v2187, %v2175
    %v2189 = vlog2.pop %v2186
    %v2190 = vmul.f32 %v2189, 0.6931472
    %v2191 = vadd.f32 %v2188, %v2190
    %2192 = vst [vmem:[#allocation3] sm:$0xff] %v2191
    %v2193 = vld [vmem:[#allocation3] sm:$0xff]
    %2194 = vrot.lane.b32.xlu0 %v2193, 1
    %v2195 = vpop.permute.xlu0 %2194
    %v2196 = vsel %vm2058, -1e+30, %v2195
    %2197 = vrot.lane.b32.xlu0 %v2193, 2
    %v2198 = vpop.permute.xlu0 %2197
    %v2199 = vsel %vm2053, -1e+30, %v2198
    %v2200 = vadd.f32 %v2199, %v2037
    %v2201 = vmax.f32 %v2193, %v2196
    %v2202 = vmax.f32 %v2201, %v2200
    %v2203 = vsub.f32 %v2193, %v2202
    %v2204 = vmul.f32 %v2203, 1.442695
    %v2205 = vpow.pop %v2204
    %v2206 = vsub.f32 %v2196, %v2202
    %v2207 = vmul.f32 %v2206, 1.442695
    %v2208 = vpow.pop %v2207
    %v2209 = vadd.f32 %v2205, %v2208
    %v2210 = vsub.f32 %v2200, %v2202
    %v2211 = vmul.f32 %v2210, 1.442695
    %v2212 = vpow.pop %v2211
    %v2213 = vadd.f32 %v2209, %v2212
    %v2214 = vld [vmem:[%s2013] sm:$0xff]
    %v2215 = vadd.f32 %v2214, %v2202
    %v2216 = vlog2.pop %v2213
    %v2217 = vmul.f32 %v2216, 0.6931472
    %v2218 = vadd.f32 %v2215, %v2217
    %2219 = vst [vmem:[#allocation3] sm:$0xff] %v2218
    %v2220 = vld [vmem:[#allocation3] sm:$0xff]
    %2221 = vrot.lane.b32.xlu0 %v2220, 1
    %v2222 = vpop.permute.xlu0 %2221
    %v2223 = vsel %vm2058, -1e+30, %v2222
    %2224 = vrot.lane.b32.xlu0 %v2220, 2
    %v2225 = vpop.permute.xlu0 %2224
    %v2226 = vsel %vm2053, -1e+30, %v2225
    %v2227 = vadd.f32 %v2226, %v2037
    %v2228 = vmax.f32 %v2220, %v2223
    %v2229 = vmax.f32 %v2228, %v2227
    %v2230 = vsub.f32 %v2220, %v2229
    %v2231 = vmul.f32 %v2230, 1.442695
    %v2232 = vpow.pop %v2231
    %v2233 = vsub.f32 %v2223, %v2229
    %v2234 = vmul.f32 %v2233, 1.442695
    %v2235 = vpow.pop %v2234
    %v2236 = vadd.f32 %v2232, %v2235
    %v2237 = vsub.f32 %v2227, %v2229
    %v2238 = vmul.f32 %v2237, 1.442695
    %v2239 = vpow.pop %v2238
    %v2240 = vadd.f32 %v2236, %v2239
    %v2241 = vld [vmem:[%s2024] sm:$0xff]
    %v2242 = vadd.f32 %v2241, %v2229
    %v2243 = vlog2.pop %v2240
    %v2244 = vmul.f32 %v2243, 0.6931472
    %v2245 = vadd.f32 %v2242, %v2244
    %2246 = vst [vmem:[#allocation3] sm:$0xff] %v2245
    %v2247 = vld [vmem:[#allocation3] sm:$0xff]
    %v2248 = vadd.f32 %v2247, %v2051
    %2249 = vmax.xlane.f32.xlu0 %v2248
    %v2250 = vpop.xlane.xlu0 %2249
    %v2251 = vsub.f32 %v2248, %v2250
    %v2252 = vmul.f32 %v2251, 1.442695
    %v2253 = vpow.pop %v2252
    %2254 = vadd.xlane.f32.xlu0 %v2253
    %v2255 = vpop.xlane.xlu0 %2254
    %v2256 = vlog2.pop %v2255
    %v2257 = vmul.f32 %v2256, 0.6931472
    %v2258 = vadd.f32 %v2250, %v2257
    %v2259 = vsub.f32 0.0, %v2258
    %2260 = vst [vmem:[#allocation7] sm:$0xff] %v2259
    // Predicated region
    $region18: #{tpu_custom_call.1} parent=1 // pred_check
      _
    $region19: #{tpu_custom_call.1} parent=1 // pred_check_branch
      %2262 = sbr.rel (0) target = $region21
    $region20: #{tpu_custom_call.1} parent=1 // pred_region
      %2264 = vsyncadd [#allocation6], 0
      %s2266 = sshll.u32 [#allocation7], 4
      %s2267 = int_to_ptr.vmem [resolvable:$true] %s2266
      %s2268 = sshll.u32 %s3, 4
      %s2269 = int_to_ptr.hbm [resolvable:$true] %s2268
      %2271 = dma.vmem_to_hbm [thread:$0]  %s2267, 128, %s2269, [#allocation6]
    $region21: #{tpu_custom_call.1} parent=1 // pred_fallthru
      _
    // Predicated region
    $region22: #{tpu_custom_call.1} parent=1 // pred_check
      _
    $region23: #{tpu_custom_call.1} parent=1 // pred_check_branch
      %2273 = sbr.rel (0) target = $region25
    $region24: #{tpu_custom_call.1} parent=1 // pred_region
      %2275 = dma.done [#allocation6], 128
    $region25: #{tpu_custom_call.1} parent=1 // pred_fallthru
      _
    %2276 = vsyncpa [#allocation5], 1
    %2277 = vsyncpa [#allocation6], 1

</llo_original>
